<compile_context>
chip_gen: v7x
topology: tpu7x:2x2x1
jax: 0.10.0
libtpu: 0.0.40
codegen_flags: <defaults>
</compile_context>

<pallas_src>
import functools
import math

import jax
import jax.numpy as jnp
from jax.experimental import pallas as pl
from jax.experimental.pallas import tpu as pltpu

# ----------------------------- small synthetic BERT config -------------------
VOCAB = 50
HIDDEN = 32
N_LAYERS = 2
N_HEADS = 2
D_HEAD = HIDDEN // N_HEADS
INTER = 64
MAX_POS = 16
SEQ = 8
BATCH = 2
LOSS_MARGIN = 0.5
TRIPLET_EPS = 1e-6          # torch pairwise_distance eps
LN_EPS = 1e-12              # BERT layer-norm eps
HEAD_PAD = 128              # lane-dense output width (head Linear zero-padded)
VMEM_LIMIT_BYTES = 32 * 1024 * 1024


# ----------------------------- in-kernel math ---------------------------------
def _gelu_tanh(x):
    # TODO(synk): HF BERT default GELU is the exact erf form; tanh approx kept
    # for a guaranteed EUP-friendly lowering (tiny numerical difference).
    return 0.5 * x * (1.0 + jnp.tanh(0.7978845608028654 * (x + 0.044715 * x * x * x)))


def _layernorm(x, g, b):
    mu = jnp.mean(x, axis=-1, keepdims=True)
    xc = x - mu
    var = jnp.mean(xc * xc, axis=-1, keepdims=True)
    return xc * jax.lax.rsqrt(var + LN_EPS) * g + b


def _encoder_kernel(emb_ref, eg_ref, eb_ref,
                    wqkv_ref, bqkv_ref, wo_ref, bo_ref, l1g_ref, l1b_ref,
                    wi_ref, bi_ref, wo2_ref, bo2_ref, l2g_ref, l2b_ref,
                    pw_ref, pb_ref, hw_ref, hb_ref, out_ref):
    """One sentence per grid step: [S, H] tokens -> [1, HEAD_PAD] head output."""
    x = _layernorm(emb_ref[0], eg_ref[...], eb_ref[...])                  # [S, H] f32

    for l in range(N_LAYERS):                    # static unroll, all VMEM-resident
        # ---- fused QKV projection (scale already folded into Q cols/bias) ----
        xb = x.astype(jnp.bfloat16)
        qkv = jnp.dot(xb, wqkv_ref[l],
                      preferred_element_type=jnp.float32) + bqkv_ref[l]   # [S, 3H]
        ctx_heads = []
        for h in range(N_HEADS):
            qh = qkv[:, h * D_HEAD:(h + 1) * D_HEAD].astype(jnp.bfloat16)
            kh = qkv[:, HIDDEN + h * D_HEAD:HIDDEN + (h + 1) * D_HEAD].astype(jnp.bfloat16)
            vh = qkv[:, 2 * HIDDEN + h * D_HEAD:2 * HIDDEN + (h + 1) * D_HEAD].astype(jnp.bfloat16)
            # q @ k.T without an explicit transpose: contract the DH axes.
            s = jax.lax.dot_general(qh, kh, (((1,), (1,)), ((), ())),
                                    preferred_element_type=jnp.float32)   # [S, S]
            s = s - jnp.max(s, axis=-1, keepdims=True)
            p = jnp.exp(s)
            p = p * pl.reciprocal(jnp.sum(p, axis=-1, keepdims=True), approx=True)
            ctx_heads.append(jnp.dot(p.astype(jnp.bfloat16), vh,
                                     preferred_element_type=jnp.float32))  # [S, DH]
        ctx = jnp.concatenate(ctx_heads, axis=-1).astype(jnp.bfloat16)     # [S, H]
        attn = jnp.dot(ctx, wo_ref[l],
                       preferred_element_type=jnp.float32) + bo_ref[l]     # bias added once
        x = _layernorm(attn + x, l1g_ref[l], l1b_ref[l])                   # residual + LN1
        inter = _gelu_tanh(jnp.dot(x.astype(jnp.bfloat16), wi_ref[l],
                                   preferred_element_type=jnp.float32) + bi_ref[l])
        ff = jnp.dot(inter.astype(jnp.bfloat16), wo2_ref[l],
                     preferred_element_type=jnp.float32) + bo2_ref[l]
        x = _layernorm(ff + x, l2g_ref[l], l2b_ref[l])                     # residual + LN2

    # ---- pooler (CLS token -> tanh) + extra Linear (zero-padded to 128 lanes) ----
    cls = x[0:1, :].astype(jnp.bfloat16)                                   # [1, H]
    pooled = jnp.tanh(jnp.dot(cls, pw_ref[...],
                              preferred_element_type=jnp.float32) + pb_ref[...])
    head = jnp.dot(pooled.astype(jnp.bfloat16), hw_ref[...],
                   preferred_element_type=jnp.float32) + hb_ref[...]       # [1, HEAD_PAD]
    out_ref[...] = head.reshape(1, 1, HEAD_PAD)                            # lane-dense store


def _triplet_loss_kernel(head_ref, out_ref, *, margin, batch):
    """torch.nn.TripletMarginLoss(margin, p=2, eps=1e-6) with mean reduction."""
    h = head_ref[...][:, 0, :HIDDEN]                                       # [3B, H], drop pad
    a = h[0:batch]
    p = h[batch:2 * batch]
    n = h[2 * batch:3 * batch]
    dap = a - p + TRIPLET_EPS
    dan = a - n + TRIPLET_EPS
    d_ap = jnp.sqrt(jnp.sum(dap * dap, axis=-1, keepdims=True))            # [B, 1]
    d_an = jnp.sqrt(jnp.sum(dan * dan, axis=-1, keepdims=True))            # [B, 1]
    hinge = jnp.maximum(d_ap - d_an + margin, 0.0)
    out_ref[0, 0] = jnp.sum(hinge) * (1.0 / batch)


# ----------------------------- parameters (deterministic) ---------------------
def init_params(key):
    def nrm(k, shape, scale=0.02):
        return scale * jax.random.normal(k, shape, dtype=jnp.float32)

    keys = iter(jax.random.split(key, 64))
    p = {
        "word_emb": nrm(next(keys), (VOCAB, HIDDEN)),
        "pos_emb": nrm(next(keys), (MAX_POS, HIDDEN)),
        "type_emb": nrm(next(keys), (2, HIDDEN)),
        "emb_ln_g": jnp.ones((HIDDEN,), jnp.float32),
        "emb_ln_b": jnp.zeros((HIDDEN,), jnp.float32),
        "pooler_w": nrm(next(keys), (HIDDEN, HIDDEN)),
        "pooler_b": jnp.zeros((HIDDEN,), jnp.float32),
        # BertEncoder.__linear
        "head_w": nrm(next(keys), (HIDDEN, HIDDEN)),
        "head_b": jnp.zeros((HIDDEN,), jnp.float32),
        "layers": [],
    }
    for _ in range(N_LAYERS):
        p["layers"].append({
            "wq": nrm(next(keys), (HIDDEN, HIDDEN)), "bq": jnp.zeros((HIDDEN,), jnp.float32),
            "wk": nrm(next(keys), (HIDDEN, HIDDEN)), "bk": jnp.zeros((HIDDEN,), jnp.float32),
            "wv": nrm(next(keys), (HIDDEN, HIDDEN)), "bv": jnp.zeros((HIDDEN,), jnp.float32),
            "wo": nrm(next(keys), (HIDDEN, HIDDEN)), "bo": jnp.zeros((HIDDEN,), jnp.float32),
            "ln1_g": jnp.ones((HIDDEN,), jnp.float32), "ln1_b": jnp.zeros((HIDDEN,), jnp.float32),
            "wi": nrm(next(keys), (HIDDEN, INTER)), "bi": jnp.zeros((INTER,), jnp.float32),
            "wo2": nrm(next(keys), (INTER, HIDDEN)), "bo2": jnp.zeros((HIDDEN,), jnp.float32),
            "ln2_g": jnp.ones((HIDDEN,), jnp.float32), "ln2_b": jnp.zeros((HIDDEN,), jnp.float32),
        })
    return p


def pack_params(p):
    """Pack weights ONCE: bf16 matmul operands, fused QKV with the attention
    scale folded in, biases as [*, 1, N] f32, head Linear zero-padded to 128
    output lanes for lane-dense stores."""
    scale = 1.0 / math.sqrt(D_HEAD)
    bf = lambda w: w.astype(jnp.bfloat16)
    layers = p["layers"]

    wqkv = jnp.stack([jnp.concatenate([l["wq"] * scale, l["wk"], l["wv"]], axis=1)
                      for l in layers])                                     # [L, H, 3H]
    bqkv = jnp.stack([jnp.concatenate([l["bq"] * scale, l["bk"], l["bv"]]).reshape(1, 3 * HIDDEN)
                      for l in layers])                                     # [L, 1, 3H]
    head_w = jnp.zeros((HIDDEN, HEAD_PAD), jnp.float32).at[:, :HIDDEN].set(p["head_w"])
    head_b = jnp.zeros((1, HEAD_PAD), jnp.float32).at[0, :HIDDEN].set(p["head_b"])

    return {
        "word_emb": p["word_emb"],
        "pos_emb": p["pos_emb"],
        "type_row": p["type_emb"][0],
        "emb_ln_g": p["emb_ln_g"].reshape(1, HIDDEN),
        "emb_ln_b": p["emb_ln_b"].reshape(1, HIDDEN),
        "wqkv": bf(wqkv),
        "bqkv": bqkv,
        "wo": bf(jnp.stack([l["wo"] for l in layers])),                    # [L, H, H]
        "bo": jnp.stack([l["bo"].reshape(1, HIDDEN) for l in layers]),
        "ln1_g": jnp.stack([l["ln1_g"].reshape(1, HIDDEN) for l in layers]),
        "ln1_b": jnp.stack([l["ln1_b"].reshape(1, HIDDEN) for l in layers]),
        "wi": bf(jnp.stack([l["wi"] for l in layers])),                    # [L, H, INTER]
        "bi": jnp.stack([l["bi"].reshape(1, INTER) for l in layers]),
        "wo2": bf(jnp.stack([l["wo2"] for l in layers])),                  # [L, INTER, H]
        "bo2": jnp.stack([l["bo2"].reshape(1, HIDDEN) for l in layers]),
        "ln2_g": jnp.stack([l["ln2_g"].reshape(1, HIDDEN) for l in layers]),
        "ln2_b": jnp.stack([l["ln2_b"].reshape(1, HIDDEN) for l in layers]),
        "pool_w": bf(p["pooler_w"]),
        "pool_b": p["pooler_b"].reshape(1, HIDDEN),
        "head_w": bf(head_w),                                              # [H, HEAD_PAD]
        "head_b": head_b,                                                  # [1, HEAD_PAD]
    }


# ----------------------------- wrappers ----------------------------------------
def _embed_lookup(packed, ids):
    """Embedding gather + pos/type add (plain-JAX glue; a gather has no clean
    rectangular BlockSpec so it stays outside the kernel)."""
    _, s = ids.shape
    return (packed["word_emb"][ids]
            + packed["pos_emb"][None, :s, :]
            + packed["type_row"][None, None, :])                           # [NBS, S, H] f32


def _encoder_args(packed, ids):
    return (_embed_lookup(packed, ids),
            packed["emb_ln_g"], packed["emb_ln_b"],
            packed["wqkv"], packed["bqkv"],
            packed["wo"], packed["bo"],
            packed["ln1_g"], packed["ln1_b"],
            packed["wi"], packed["bi"],
            packed["wo2"], packed["bo2"],
            packed["ln2_g"], packed["ln2_b"],
            packed["pool_w"], packed["pool_b"],
            packed["head_w"], packed["head_b"])


def _vmem_spec():
    return pl.BlockSpec(memory_space=pltpu.MemorySpace.VMEM)


def _encoder_pallas(packed, ids):
    """Whole encoder per sentence = 1 grid step; grid over sentences is
    'parallel' so v7x's two TensorCores split the batch."""
    nbs, s = ids.shape
    args = _encoder_args(packed, ids)
    in_specs = [pl.BlockSpec((1, s, HIDDEN), lambda i: (i, 0, 0))]
    in_specs += [_vmem_spec()] * (len(args) - 1)
    return pl.pallas_call(
        _encoder_kernel,
        out_shape=jax.ShapeDtypeStruct((nbs, 1, HEAD_PAD), jnp.float32),
        grid=(nbs,),
        in_specs=in_specs,
        out_specs=pl.BlockSpec((1, 1, HEAD_PAD), lambda i: (i, 0, 0)),
        compiler_params=pltpu.CompilerParams(
            dimension_semantics=("parallel",),
            vmem_limit_bytes=VMEM_LIMIT_BYTES),
    )(*args)


@jax.jit
def bert_encoder_forward(packed, ids):
    head = _encoder_pallas(packed, ids)              # [NBS, 1, HEAD_PAD]
    return head[:, 0, :HIDDEN]                       # [NBS, HIDDEN]


@jax.jit
def bert_triplet_forward(packed, ids3):
    batch = ids3.shape[0] // 3
    head3 = _encoder_pallas(packed, ids3)            # [3B, 1, HEAD_PAD]
    kern = functools.partial(_triplet_loss_kernel, margin=LOSS_MARGIN, batch=batch)
    loss = pl.pallas_call(
        kern,
        out_shape=jax.ShapeDtypeStruct((1, 1), jnp.float32),
        in_specs=[_vmem_spec()],
        out_specs=pl.BlockSpec(memory_space=pltpu.MemorySpace.SMEM),
    )(head3)
    return loss[0, 0]


def bert_module_forward(packed, sentence, positive_sentence=None, negative_sentence=None):
    if positive_sentence is None:
        return bert_encoder_forward(packed, sentence)
    if negative_sentence is None:
        both = bert_encoder_forward(
            packed, jnp.concatenate([sentence, positive_sentence], axis=0))
        b = sentence.shape[0]
        return both[:b], both[b:]
    ids3 = jnp.concatenate([sentence, positive_sentence, negative_sentence], axis=0)
    return bert_triplet_forward(packed, ids3)


# ----------------------------- main ---------------------------------------------
if __name__ == "__main__":
    key = jax.random.PRNGKey(0)
    pkey, k1, k2, k3 = jax.random.split(key, 4)
    params = pack_params(init_params(pkey))

    sentence = jax.random.randint(k1, (BATCH, SEQ), 0, VOCAB, dtype=jnp.int32)
    positive = jax.random.randint(k2, (BATCH, SEQ), 0, VOCAB, dtype=jnp.int32)
    negative = jax.random.randint(k3, (BATCH, SEQ), 0, VOCAB, dtype=jnp.int32)

    emb = bert_module_forward(params, sentence)                        # [B, H]
    pair = bert_module_forward(params, sentence, positive)             # ([B,H], [B,H])
    loss = bert_module_forward(params, sentence, positive, negative)   # scalar

    jax.block_until_ready((emb, pair, loss))
    assert emb.shape == (BATCH, HIDDEN)
    assert pair[0].shape == (BATCH, HIDDEN) and pair[1].shape == (BATCH, HIDDEN)
    assert loss.shape == ()
    print("KERNEL_OK")
</pallas_src>

<mosaic_0001>
module attributes {stable_mosaic.version = 11 : i64} {
  func.func @_encoder_kernel(%arg0: i32, %arg1: memref<1x8x32xf32, #tpu.memory_space<vmem>>, %arg2: memref<1x32xf32, #tpu.memory_space<vmem>>, %arg3: memref<1x32xf32, #tpu.memory_space<vmem>>, %arg4: memref<2x32x96xbf16, #tpu.memory_space<vmem>>, %arg5: memref<2x1x96xf32, #tpu.memory_space<vmem>>, %arg6: memref<2x32x32xbf16, #tpu.memory_space<vmem>>, %arg7: memref<2x1x32xf32, #tpu.memory_space<vmem>>, %arg8: memref<2x1x32xf32, #tpu.memory_space<vmem>>, %arg9: memref<2x1x32xf32, #tpu.memory_space<vmem>>, %arg10: memref<2x32x64xbf16, #tpu.memory_space<vmem>>, %arg11: memref<2x1x64xf32, #tpu.memory_space<vmem>>, %arg12: memref<2x64x32xbf16, #tpu.memory_space<vmem>>, %arg13: memref<2x1x32xf32, #tpu.memory_space<vmem>>, %arg14: memref<2x1x32xf32, #tpu.memory_space<vmem>>, %arg15: memref<2x1x32xf32, #tpu.memory_space<vmem>>, %arg16: memref<32x32xbf16, #tpu.memory_space<vmem>>, %arg17: memref<1x32xf32, #tpu.memory_space<vmem>>, %arg18: memref<32x128xbf16, #tpu.memory_space<vmem>>, %arg19: memref<1x128xf32, #tpu.memory_space<vmem>>, %arg20: memref<1x1x128xf32, #tpu.memory_space<vmem>>) attributes {dimension_semantics = [#tpu.dimension_semantics<parallel>], iteration_bounds = array<i64: 2>, scalar_prefetch = 0 : i64, scratch_operands = 0 : i64, tpu.core_type = #tpu.core_type<tc>, window_params = [{transform_indices = @transform_0, window_bounds = array<i64: 1, 8, 32>}, {pipeline_mode = #tpu.pipeline_mode<synchronous>, transform_indices = @transform_1, window_bounds = array<i64: 1, 32>}, {pipeline_mode = #tpu.pipeline_mode<synchronous>, transform_indices = @transform_2, window_bounds = array<i64: 1, 32>}, {pipeline_mode = #tpu.pipeline_mode<synchronous>, transform_indices = @transform_3, window_bounds = array<i64: 2, 32, 96>}, {pipeline_mode = #tpu.pipeline_mode<synchronous>, transform_indices = @transform_4, window_bounds = array<i64: 2, 1, 96>}, {pipeline_mode = #tpu.pipeline_mode<synchronous>, transform_indices = @transform_5, window_bounds = array<i64: 2, 32, 32>}, {pipeline_mode = #tpu.pipeline_mode<synchronous>, transform_indices = @transform_6, window_bounds = array<i64: 2, 1, 32>}, {pipeline_mode = #tpu.pipeline_mode<synchronous>, transform_indices = @transform_7, window_bounds = array<i64: 2, 1, 32>}, {pipeline_mode = #tpu.pipeline_mode<synchronous>, transform_indices = @transform_8, window_bounds = array<i64: 2, 1, 32>}, {pipeline_mode = #tpu.pipeline_mode<synchronous>, transform_indices = @transform_9, window_bounds = array<i64: 2, 32, 64>}, {pipeline_mode = #tpu.pipeline_mode<synchronous>, transform_indices = @transform_10, window_bounds = array<i64: 2, 1, 64>}, {pipeline_mode = #tpu.pipeline_mode<synchronous>, transform_indices = @transform_11, window_bounds = array<i64: 2, 64, 32>}, {pipeline_mode = #tpu.pipeline_mode<synchronous>, transform_indices = @transform_12, window_bounds = array<i64: 2, 1, 32>}, {pipeline_mode = #tpu.pipeline_mode<synchronous>, transform_indices = @transform_13, window_bounds = array<i64: 2, 1, 32>}, {pipeline_mode = #tpu.pipeline_mode<synchronous>, transform_indices = @transform_14, window_bounds = array<i64: 2, 1, 32>}, {pipeline_mode = #tpu.pipeline_mode<synchronous>, transform_indices = @transform_15, window_bounds = array<i64: 32, 32>}, {pipeline_mode = #tpu.pipeline_mode<synchronous>, transform_indices = @transform_16, window_bounds = array<i64: 1, 32>}, {pipeline_mode = #tpu.pipeline_mode<synchronous>, transform_indices = @transform_17, window_bounds = array<i64: 32, 128>}, {pipeline_mode = #tpu.pipeline_mode<synchronous>, transform_indices = @transform_18, window_bounds = array<i64: 1, 128>}, {transform_indices = @transform_19, window_bounds = array<i64: 1, 1, 128>}]} {
    %c0 = arith.constant 0 : index
    %c0_0 = arith.constant 0 : index
    %c0_1 = arith.constant 0 : index
    %0 = vector.load %arg1[%c0, %c0_0, %c0_1] : memref<1x8x32xf32, #tpu.memory_space<vmem>>, vector<1x8x32xf32>
    %1 = vector.shape_cast %0 : vector<1x8x32xf32> to vector<8x32xf32>
    %c0_2 = arith.constant 0 : index
    %c0_3 = arith.constant 0 : index
    %2 = vector.load %arg2[%c0_2, %c0_3] : memref<1x32xf32, #tpu.memory_space<vmem>>, vector<1x32xf32>
    %c0_4 = arith.constant 0 : index
    %c0_5 = arith.constant 0 : index
    %3 = vector.load %arg3[%c0_4, %c0_5] : memref<1x32xf32, #tpu.memory_space<vmem>>, vector<1x32xf32>
    %cst = arith.constant dense<0.000000e+00> : vector<8xf32>
    %4 = vector.multi_reduction <add>, %1, %cst [1] : vector<8x32xf32> to vector<8xf32>
    %5 = vector.shape_cast %4 : vector<8xf32> to vector<8x1xf32>
    %cst_6 = arith.constant 3.200000e+01 : f32
    %6 = vector.broadcast %cst_6 : f32 to vector<8x1xf32>
    %7 = arith.divf %5, %6 : vector<8x1xf32>
    %8 = vector.broadcast %7 : vector<8x1xf32> to vector<8x32xf32>
    %9 = arith.subf %1, %8 : vector<8x32xf32>
    %10 = arith.mulf %9, %9 : vector<8x32xf32>
    %cst_7 = arith.constant dense<0.000000e+00> : vector<8xf32>
    %11 = vector.multi_reduction <add>, %10, %cst_7 [1] : vector<8x32xf32> to vector<8xf32>
    %12 = vector.shape_cast %11 : vector<8xf32> to vector<8x1xf32>
    %cst_8 = arith.constant 3.200000e+01 : f32
    %13 = vector.broadcast %cst_8 : f32 to vector<8x1xf32>
    %14 = arith.divf %12, %13 : vector<8x1xf32>
    %cst_9 = arith.constant 9.99999996E-13 : f32
    %15 = vector.broadcast %cst_9 : f32 to vector<8x1xf32>
    %16 = arith.addf %14, %15 : vector<8x1xf32>
    %17 = math.rsqrt %16 : vector<8x1xf32>
    %18 = vector.broadcast %17 : vector<8x1xf32> to vector<8x32xf32>
    %19 = arith.mulf %9, %18 : vector<8x32xf32>
    %20 = vector.broadcast %2 : vector<1x32xf32> to vector<8x32xf32>
    %21 = arith.mulf %19, %20 : vector<8x32xf32>
    %22 = vector.broadcast %3 : vector<1x32xf32> to vector<8x32xf32>
    %23 = arith.addf %21, %22 : vector<8x32xf32>
    %24 = arith.truncf %23 : vector<8x32xf32> to vector<8x32xbf16>
    %c0_10 = arith.constant 0 : index
    %c0_11 = arith.constant 0 : index
    %c0_12 = arith.constant 0 : index
    %25 = vector.load %arg4[%c0_10, %c0_11, %c0_12] : memref<2x32x96xbf16, #tpu.memory_space<vmem>>, vector<1x32x96xbf16>
    %26 = vector.shape_cast %25 : vector<1x32x96xbf16> to vector<32x96xbf16>
    %cst_13 = arith.constant dense<0.000000e+00> : vector<8x96xf32>
    %27 = tpu.matmul %24, %26, %cst_13 {dimension_numbers = #tpu.dot_dimension_numbers<[1], [0], [0], [1], [0, 0, 1, 1], [], []>} : vector<8x32xbf16>, vector<32x96xbf16>, vector<8x96xf32> -> vector<8x96xf32>
    %c0_14 = arith.constant 0 : index
    %c0_15 = arith.constant 0 : index
    %c0_16 = arith.constant 0 : index
    %28 = vector.load %arg5[%c0_14, %c0_15, %c0_16] : memref<2x1x96xf32, #tpu.memory_space<vmem>>, vector<1x1x96xf32>
    %29 = vector.shape_cast %28 : vector<1x1x96xf32> to vector<1x96xf32>
    %30 = vector.broadcast %29 : vector<1x96xf32> to vector<8x96xf32>
    %31 = arith.addf %27, %30 : vector<8x96xf32>
    %32 = vector.extract_strided_slice %31 {offsets = [0, 0], sizes = [8, 16], strides = [1, 1]} : vector<8x96xf32> to vector<8x16xf32>
    %33 = arith.truncf %32 : vector<8x16xf32> to vector<8x16xbf16>
    %34 = vector.extract_strided_slice %31 {offsets = [0, 32], sizes = [8, 16], strides = [1, 1]} : vector<8x96xf32> to vector<8x16xf32>
    %35 = arith.truncf %34 : vector<8x16xf32> to vector<8x16xbf16>
    %36 = vector.extract_strided_slice %31 {offsets = [0, 64], sizes = [8, 16], strides = [1, 1]} : vector<8x96xf32> to vector<8x16xf32>
    %37 = arith.truncf %36 : vector<8x16xf32> to vector<8x16xbf16>
    %cst_17 = arith.constant dense<0.000000e+00> : vector<8x8xf32>
    %38 = tpu.matmul %33, %35, %cst_17 {dimension_numbers = #tpu.dot_dimension_numbers<[1], [1], [0], [0], [0, 0, 1, 0], [], []>} : vector<8x16xbf16>, vector<8x16xbf16>, vector<8x8xf32> -> vector<8x8xf32>
    %cst_18 = arith.constant dense<0xFF800000> : vector<8xf32>
    %39 = vector.multi_reduction <maximumf>, %38, %cst_18 [1] : vector<8x8xf32> to vector<8xf32>
    %40 = vector.shape_cast %39 : vector<8xf32> to vector<8x1xf32>
    %41 = vector.broadcast %40 : vector<8x1xf32> to vector<8x8xf32>
    %42 = arith.subf %38, %41 : vector<8x8xf32>
    %43 = math.exp %42 : vector<8x8xf32>
    %cst_19 = arith.constant dense<0.000000e+00> : vector<8xf32>
    %44 = vector.multi_reduction <add>, %43, %cst_19 [1] : vector<8x8xf32> to vector<8xf32>
    %45 = vector.shape_cast %44 : vector<8xf32> to vector<8x1xf32>
    %46 = tpu.reciprocal %45 {approx = true} : vector<8x1xf32> -> vector<8x1xf32>
    %47 = vector.broadcast %46 : vector<8x1xf32> to vector<8x8xf32>
    %48 = arith.mulf %43, %47 : vector<8x8xf32>
    %49 = arith.truncf %48 : vector<8x8xf32> to vector<8x8xbf16>
    %cst_20 = arith.constant dense<0.000000e+00> : vector<8x16xf32>
    %50 = tpu.matmul %49, %37, %cst_20 {dimension_numbers = #tpu.dot_dimension_numbers<[1], [0], [0], [1], [0, 0, 1, 1], [], []>} : vector<8x8xbf16>, vector<8x16xbf16>, vector<8x16xf32> -> vector<8x16xf32>
    %51 = vector.extract_strided_slice %31 {offsets = [0, 16], sizes = [8, 16], strides = [1, 1]} : vector<8x96xf32> to vector<8x16xf32>
    %52 = arith.truncf %51 : vector<8x16xf32> to vector<8x16xbf16>
    %53 = vector.extract_strided_slice %31 {offsets = [0, 48], sizes = [8, 16], strides = [1, 1]} : vector<8x96xf32> to vector<8x16xf32>
    %54 = arith.truncf %53 : vector<8x16xf32> to vector<8x16xbf16>
    %55 = vector.extract_strided_slice %31 {offsets = [0, 80], sizes = [8, 16], strides = [1, 1]} : vector<8x96xf32> to vector<8x16xf32>
    %56 = arith.truncf %55 : vector<8x16xf32> to vector<8x16xbf16>
    %cst_21 = arith.constant dense<0.000000e+00> : vector<8x8xf32>
    %57 = tpu.matmul %52, %54, %cst_21 {dimension_numbers = #tpu.dot_dimension_numbers<[1], [1], [0], [0], [0, 0, 1, 0], [], []>} : vector<8x16xbf16>, vector<8x16xbf16>, vector<8x8xf32> -> vector<8x8xf32>
    %cst_22 = arith.constant dense<0xFF800000> : vector<8xf32>
    %58 = vector.multi_reduction <maximumf>, %57, %cst_22 [1] : vector<8x8xf32> to vector<8xf32>
    %59 = vector.shape_cast %58 : vector<8xf32> to vector<8x1xf32>
    %60 = vector.broadcast %59 : vector<8x1xf32> to vector<8x8xf32>
    %61 = arith.subf %57, %60 : vector<8x8xf32>
    %62 = math.exp %61 : vector<8x8xf32>
    %cst_23 = arith.constant dense<0.000000e+00> : vector<8xf32>
    %63 = vector.multi_reduction <add>, %62, %cst_23 [1] : vector<8x8xf32> to vector<8xf32>
    %64 = vector.shape_cast %63 : vector<8xf32> to vector<8x1xf32>
    %65 = tpu.reciprocal %64 {approx = true} : vector<8x1xf32> -> vector<8x1xf32>
    %66 = vector.broadcast %65 : vector<8x1xf32> to vector<8x8xf32>
    %67 = arith.mulf %62, %66 : vector<8x8xf32>
    %68 = arith.truncf %67 : vector<8x8xf32> to vector<8x8xbf16>
    %cst_24 = arith.constant dense<0.000000e+00> : vector<8x16xf32>
    %69 = tpu.matmul %68, %56, %cst_24 {dimension_numbers = #tpu.dot_dimension_numbers<[1], [0], [0], [1], [0, 0, 1, 1], [], []>} : vector<8x8xbf16>, vector<8x16xbf16>, vector<8x16xf32> -> vector<8x16xf32>
    %70 = tpu.concatenate %50, %69 in 1 : vector<8x16xf32>, vector<8x16xf32> -> vector<8x32xf32>
    %71 = arith.truncf %70 : vector<8x32xf32> to vector<8x32xbf16>
    %c0_25 = arith.constant 0 : index
    %c0_26 = arith.constant 0 : index
    %c0_27 = arith.constant 0 : index
    %72 = vector.load %arg6[%c0_25, %c0_26, %c0_27] : memref<2x32x32xbf16, #tpu.memory_space<vmem>>, vector<1x32x32xbf16>
    %73 = vector.shape_cast %72 : vector<1x32x32xbf16> to vector<32x32xbf16>
    %cst_28 = arith.constant dense<0.000000e+00> : vector<8x32xf32>
    %74 = tpu.matmul %71, %73, %cst_28 {dimension_numbers = #tpu.dot_dimension_numbers<[1], [0], [0], [1], [0, 0, 1, 1], [], []>} : vector<8x32xbf16>, vector<32x32xbf16>, vector<8x32xf32> -> vector<8x32xf32>
    %c0_29 = arith.constant 0 : index
    %c0_30 = arith.constant 0 : index
    %c0_31 = arith.constant 0 : index
    %75 = vector.load %arg7[%c0_29, %c0_30, %c0_31] : memref<2x1x32xf32, #tpu.memory_space<vmem>>, vector<1x1x32xf32>
    %76 = vector.shape_cast %75 : vector<1x1x32xf32> to vector<1x32xf32>
    %77 = vector.broadcast %76 : vector<1x32xf32> to vector<8x32xf32>
    %78 = arith.addf %74, %77 : vector<8x32xf32>
    %79 = arith.addf %78, %23 : vector<8x32xf32>
    %c0_32 = arith.constant 0 : index
    %c0_33 = arith.constant 0 : index
    %c0_34 = arith.constant 0 : index
    %80 = vector.load %arg8[%c0_32, %c0_33, %c0_34] : memref<2x1x32xf32, #tpu.memory_space<vmem>>, vector<1x1x32xf32>
    %81 = vector.shape_cast %80 : vector<1x1x32xf32> to vector<1x32xf32>
    %c0_35 = arith.constant 0 : index
    %c0_36 = arith.constant 0 : index
    %c0_37 = arith.constant 0 : index
    %82 = vector.load %arg9[%c0_35, %c0_36, %c0_37] : memref<2x1x32xf32, #tpu.memory_space<vmem>>, vector<1x1x32xf32>
    %83 = vector.shape_cast %82 : vector<1x1x32xf32> to vector<1x32xf32>
    %cst_38 = arith.constant dense<0.000000e+00> : vector<8xf32>
    %84 = vector.multi_reduction <add>, %79, %cst_38 [1] : vector<8x32xf32> to vector<8xf32>
    %85 = vector.shape_cast %84 : vector<8xf32> to vector<8x1xf32>
    %cst_39 = arith.constant 3.200000e+01 : f32
    %86 = vector.broadcast %cst_39 : f32 to vector<8x1xf32>
    %87 = arith.divf %85, %86 : vector<8x1xf32>
    %88 = vector.broadcast %87 : vector<8x1xf32> to vector<8x32xf32>
    %89 = arith.subf %79, %88 : vector<8x32xf32>
    %90 = arith.mulf %89, %89 : vector<8x32xf32>
    %cst_40 = arith.constant dense<0.000000e+00> : vector<8xf32>
    %91 = vector.multi_reduction <add>, %90, %cst_40 [1] : vector<8x32xf32> to vector<8xf32>
    %92 = vector.shape_cast %91 : vector<8xf32> to vector<8x1xf32>
    %cst_41 = arith.constant 3.200000e+01 : f32
    %93 = vector.broadcast %cst_41 : f32 to vector<8x1xf32>
    %94 = arith.divf %92, %93 : vector<8x1xf32>
    %cst_42 = arith.constant 9.99999996E-13 : f32
    %95 = vector.broadcast %cst_42 : f32 to vector<8x1xf32>
    %96 = arith.addf %94, %95 : vector<8x1xf32>
    %97 = math.rsqrt %96 : vector<8x1xf32>
    %98 = vector.broadcast %97 : vector<8x1xf32> to vector<8x32xf32>
    %99 = arith.mulf %89, %98 : vector<8x32xf32>
    %100 = vector.broadcast %81 : vector<1x32xf32> to vector<8x32xf32>
    %101 = arith.mulf %99, %100 : vector<8x32xf32>
    %102 = vector.broadcast %83 : vector<1x32xf32> to vector<8x32xf32>
    %103 = arith.addf %101, %102 : vector<8x32xf32>
    %104 = arith.truncf %103 : vector<8x32xf32> to vector<8x32xbf16>
    %c0_43 = arith.constant 0 : index
    %c0_44 = arith.constant 0 : index
    %c0_45 = arith.constant 0 : index
    %105 = vector.load %arg10[%c0_43, %c0_44, %c0_45] : memref<2x32x64xbf16, #tpu.memory_space<vmem>>, vector<1x32x64xbf16>
    %106 = vector.shape_cast %105 : vector<1x32x64xbf16> to vector<32x64xbf16>
    %cst_46 = arith.constant dense<0.000000e+00> : vector<8x64xf32>
    %107 = tpu.matmul %104, %106, %cst_46 {dimension_numbers = #tpu.dot_dimension_numbers<[1], [0], [0], [1], [0, 0, 1, 1], [], []>} : vector<8x32xbf16>, vector<32x64xbf16>, vector<8x64xf32> -> vector<8x64xf32>
    %c0_47 = arith.constant 0 : index
    %c0_48 = arith.constant 0 : index
    %c0_49 = arith.constant 0 : index
    %108 = vector.load %arg11[%c0_47, %c0_48, %c0_49] : memref<2x1x64xf32, #tpu.memory_space<vmem>>, vector<1x1x64xf32>
    %109 = vector.shape_cast %108 : vector<1x1x64xf32> to vector<1x64xf32>
    %110 = vector.broadcast %109 : vector<1x64xf32> to vector<8x64xf32>
    %111 = arith.addf %107, %110 : vector<8x64xf32>
    %cst_50 = arith.constant 5.000000e-01 : f32
    %112 = vector.broadcast %cst_50 : f32 to vector<8x64xf32>
    %113 = arith.mulf %112, %111 : vector<8x64xf32>
    %cst_51 = arith.constant 4.471500e-02 : f32
    %114 = vector.broadcast %cst_51 : f32 to vector<8x64xf32>
    %115 = arith.mulf %114, %111 : vector<8x64xf32>
    %116 = arith.mulf %115, %111 : vector<8x64xf32>
    %117 = arith.mulf %116, %111 : vector<8x64xf32>
    %118 = arith.addf %111, %117 : vector<8x64xf32>
    %cst_52 = arith.constant 0.797884583 : f32
    %119 = vector.broadcast %cst_52 : f32 to vector<8x64xf32>
    %120 = arith.mulf %119, %118 : vector<8x64xf32>
    %121 = math.tanh %120 : vector<8x64xf32>
    %cst_53 = arith.constant 1.000000e+00 : f32
    %122 = vector.broadcast %cst_53 : f32 to vector<8x64xf32>
    %123 = arith.addf %122, %121 : vector<8x64xf32>
    %124 = arith.mulf %113, %123 : vector<8x64xf32>
    %125 = arith.truncf %124 : vector<8x64xf32> to vector<8x64xbf16>
    %c0_54 = arith.constant 0 : index
    %c0_55 = arith.constant 0 : index
    %c0_56 = arith.constant 0 : index
    %126 = vector.load %arg12[%c0_54, %c0_55, %c0_56] : memref<2x64x32xbf16, #tpu.memory_space<vmem>>, vector<1x64x32xbf16>
    %127 = vector.shape_cast %126 : vector<1x64x32xbf16> to vector<64x32xbf16>
    %cst_57 = arith.constant dense<0.000000e+00> : vector<8x32xf32>
    %128 = tpu.matmul %125, %127, %cst_57 {dimension_numbers = #tpu.dot_dimension_numbers<[1], [0], [0], [1], [0, 0, 1, 1], [], []>} : vector<8x64xbf16>, vector<64x32xbf16>, vector<8x32xf32> -> vector<8x32xf32>
    %c0_58 = arith.constant 0 : index
    %c0_59 = arith.constant 0 : index
    %c0_60 = arith.constant 0 : index
    %129 = vector.load %arg13[%c0_58, %c0_59, %c0_60] : memref<2x1x32xf32, #tpu.memory_space<vmem>>, vector<1x1x32xf32>
    %130 = vector.shape_cast %129 : vector<1x1x32xf32> to vector<1x32xf32>
    %131 = vector.broadcast %130 : vector<1x32xf32> to vector<8x32xf32>
    %132 = arith.addf %128, %131 : vector<8x32xf32>
    %133 = arith.addf %132, %103 : vector<8x32xf32>
    %c0_61 = arith.constant 0 : index
    %c0_62 = arith.constant 0 : index
    %c0_63 = arith.constant 0 : index
    %134 = vector.load %arg14[%c0_61, %c0_62, %c0_63] : memref<2x1x32xf32, #tpu.memory_space<vmem>>, vector<1x1x32xf32>
    %135 = vector.shape_cast %134 : vector<1x1x32xf32> to vector<1x32xf32>
    %c0_64 = arith.constant 0 : index
    %c0_65 = arith.constant 0 : index
    %c0_66 = arith.constant 0 : index
    %136 = vector.load %arg15[%c0_64, %c0_65, %c0_66] : memref<2x1x32xf32, #tpu.memory_space<vmem>>, vector<1x1x32xf32>
    %137 = vector.shape_cast %136 : vector<1x1x32xf32> to vector<1x32xf32>
    %cst_67 = arith.constant dense<0.000000e+00> : vector<8xf32>
    %138 = vector.multi_reduction <add>, %133, %cst_67 [1] : vector<8x32xf32> to vector<8xf32>
    %139 = vector.shape_cast %138 : vector<8xf32> to vector<8x1xf32>
    %cst_68 = arith.constant 3.200000e+01 : f32
    %140 = vector.broadcast %cst_68 : f32 to vector<8x1xf32>
    %141 = arith.divf %139, %140 : vector<8x1xf32>
    %142 = vector.broadcast %141 : vector<8x1xf32> to vector<8x32xf32>
    %143 = arith.subf %133, %142 : vector<8x32xf32>
    %144 = arith.mulf %143, %143 : vector<8x32xf32>
    %cst_69 = arith.constant dense<0.000000e+00> : vector<8xf32>
    %145 = vector.multi_reduction <add>, %144, %cst_69 [1] : vector<8x32xf32> to vector<8xf32>
    %146 = vector.shape_cast %145 : vector<8xf32> to vector<8x1xf32>
    %cst_70 = arith.constant 3.200000e+01 : f32
    %147 = vector.broadcast %cst_70 : f32 to vector<8x1xf32>
    %148 = arith.divf %146, %147 : vector<8x1xf32>
    %cst_71 = arith.constant 9.99999996E-13 : f32
    %149 = vector.broadcast %cst_71 : f32 to vector<8x1xf32>
    %150 = arith.addf %148, %149 : vector<8x1xf32>
    %151 = math.rsqrt %150 : vector<8x1xf32>
    %152 = vector.broadcast %151 : vector<8x1xf32> to vector<8x32xf32>
    %153 = arith.mulf %143, %152 : vector<8x32xf32>
    %154 = vector.broadcast %135 : vector<1x32xf32> to vector<8x32xf32>
    %155 = arith.mulf %153, %154 : vector<8x32xf32>
    %156 = vector.broadcast %137 : vector<1x32xf32> to vector<8x32xf32>
    %157 = arith.addf %155, %156 : vector<8x32xf32>
    %158 = arith.truncf %157 : vector<8x32xf32> to vector<8x32xbf16>
    %c1 = arith.constant 1 : index
    %c0_72 = arith.constant 0 : index
    %c0_73 = arith.constant 0 : index
    %159 = vector.load %arg4[%c1, %c0_72, %c0_73] : memref<2x32x96xbf16, #tpu.memory_space<vmem>>, vector<1x32x96xbf16>
    %160 = vector.shape_cast %159 : vector<1x32x96xbf16> to vector<32x96xbf16>
    %cst_74 = arith.constant dense<0.000000e+00> : vector<8x96xf32>
    %161 = tpu.matmul %158, %160, %cst_74 {dimension_numbers = #tpu.dot_dimension_numbers<[1], [0], [0], [1], [0, 0, 1, 1], [], []>} : vector<8x32xbf16>, vector<32x96xbf16>, vector<8x96xf32> -> vector<8x96xf32>
    %c1_75 = arith.constant 1 : index
    %c0_76 = arith.constant 0 : index
    %c0_77 = arith.constant 0 : index
    %162 = vector.load %arg5[%c1_75, %c0_76, %c0_77] : memref<2x1x96xf32, #tpu.memory_space<vmem>>, vector<1x1x96xf32>
    %163 = vector.shape_cast %162 : vector<1x1x96xf32> to vector<1x96xf32>
    %164 = vector.broadcast %163 : vector<1x96xf32> to vector<8x96xf32>
    %165 = arith.addf %161, %164 : vector<8x96xf32>
    %166 = vector.extract_strided_slice %165 {offsets = [0, 0], sizes = [8, 16], strides = [1, 1]} : vector<8x96xf32> to vector<8x16xf32>
    %167 = arith.truncf %166 : vector<8x16xf32> to vector<8x16xbf16>
    %168 = vector.extract_strided_slice %165 {offsets = [0, 32], sizes = [8, 16], strides = [1, 1]} : vector<8x96xf32> to vector<8x16xf32>
    %169 = arith.truncf %168 : vector<8x16xf32> to vector<8x16xbf16>
    %170 = vector.extract_strided_slice %165 {offsets = [0, 64], sizes = [8, 16], strides = [1, 1]} : vector<8x96xf32> to vector<8x16xf32>
    %171 = arith.truncf %170 : vector<8x16xf32> to vector<8x16xbf16>
    %cst_78 = arith.constant dense<0.000000e+00> : vector<8x8xf32>
    %172 = tpu.matmul %167, %169, %cst_78 {dimension_numbers = #tpu.dot_dimension_numbers<[1], [1], [0], [0], [0, 0, 1, 0], [], []>} : vector<8x16xbf16>, vector<8x16xbf16>, vector<8x8xf32> -> vector<8x8xf32>
    %cst_79 = arith.constant dense<0xFF800000> : vector<8xf32>
    %173 = vector.multi_reduction <maximumf>, %172, %cst_79 [1] : vector<8x8xf32> to vector<8xf32>
    %174 = vector.shape_cast %173 : vector<8xf32> to vector<8x1xf32>
    %175 = vector.broadcast %174 : vector<8x1xf32> to vector<8x8xf32>
    %176 = arith.subf %172, %175 : vector<8x8xf32>
    %177 = math.exp %176 : vector<8x8xf32>
    %cst_80 = arith.constant dense<0.000000e+00> : vector<8xf32>
    %178 = vector.multi_reduction <add>, %177, %cst_80 [1] : vector<8x8xf32> to vector<8xf32>
    %179 = vector.shape_cast %178 : vector<8xf32> to vector<8x1xf32>
    %180 = tpu.reciprocal %179 {approx = true} : vector<8x1xf32> -> vector<8x1xf32>
    %181 = vector.broadcast %180 : vector<8x1xf32> to vector<8x8xf32>
    %182 = arith.mulf %177, %181 : vector<8x8xf32>
    %183 = arith.truncf %182 : vector<8x8xf32> to vector<8x8xbf16>
    %cst_81 = arith.constant dense<0.000000e+00> : vector<8x16xf32>
    %184 = tpu.matmul %183, %171, %cst_81 {dimension_numbers = #tpu.dot_dimension_numbers<[1], [0], [0], [1], [0, 0, 1, 1], [], []>} : vector<8x8xbf16>, vector<8x16xbf16>, vector<8x16xf32> -> vector<8x16xf32>
    %185 = vector.extract_strided_slice %165 {offsets = [0, 16], sizes = [8, 16], strides = [1, 1]} : vector<8x96xf32> to vector<8x16xf32>
    %186 = arith.truncf %185 : vector<8x16xf32> to vector<8x16xbf16>
    %187 = vector.extract_strided_slice %165 {offsets = [0, 48], sizes = [8, 16], strides = [1, 1]} : vector<8x96xf32> to vector<8x16xf32>
    %188 = arith.truncf %187 : vector<8x16xf32> to vector<8x16xbf16>
    %189 = vector.extract_strided_slice %165 {offsets = [0, 80], sizes = [8, 16], strides = [1, 1]} : vector<8x96xf32> to vector<8x16xf32>
    %190 = arith.truncf %189 : vector<8x16xf32> to vector<8x16xbf16>
    %cst_82 = arith.constant dense<0.000000e+00> : vector<8x8xf32>
    %191 = tpu.matmul %186, %188, %cst_82 {dimension_numbers = #tpu.dot_dimension_numbers<[1], [1], [0], [0], [0, 0, 1, 0], [], []>} : vector<8x16xbf16>, vector<8x16xbf16>, vector<8x8xf32> -> vector<8x8xf32>
    %cst_83 = arith.constant dense<0xFF800000> : vector<8xf32>
    %192 = vector.multi_reduction <maximumf>, %191, %cst_83 [1] : vector<8x8xf32> to vector<8xf32>
    %193 = vector.shape_cast %192 : vector<8xf32> to vector<8x1xf32>
    %194 = vector.broadcast %193 : vector<8x1xf32> to vector<8x8xf32>
    %195 = arith.subf %191, %194 : vector<8x8xf32>
    %196 = math.exp %195 : vector<8x8xf32>
    %cst_84 = arith.constant dense<0.000000e+00> : vector<8xf32>
    %197 = vector.multi_reduction <add>, %196, %cst_84 [1] : vector<8x8xf32> to vector<8xf32>
    %198 = vector.shape_cast %197 : vector<8xf32> to vector<8x1xf32>
    %199 = tpu.reciprocal %198 {approx = true} : vector<8x1xf32> -> vector<8x1xf32>
    %200 = vector.broadcast %199 : vector<8x1xf32> to vector<8x8xf32>
    %201 = arith.mulf %196, %200 : vector<8x8xf32>
    %202 = arith.truncf %201 : vector<8x8xf32> to vector<8x8xbf16>
    %cst_85 = arith.constant dense<0.000000e+00> : vector<8x16xf32>
    %203 = tpu.matmul %202, %190, %cst_85 {dimension_numbers = #tpu.dot_dimension_numbers<[1], [0], [0], [1], [0, 0, 1, 1], [], []>} : vector<8x8xbf16>, vector<8x16xbf16>, vector<8x16xf32> -> vector<8x16xf32>
    %204 = tpu.concatenate %184, %203 in 1 : vector<8x16xf32>, vector<8x16xf32> -> vector<8x32xf32>
    %205 = arith.truncf %204 : vector<8x32xf32> to vector<8x32xbf16>
    %c1_86 = arith.constant 1 : index
    %c0_87 = arith.constant 0 : index
    %c0_88 = arith.constant 0 : index
    %206 = vector.load %arg6[%c1_86, %c0_87, %c0_88] : memref<2x32x32xbf16, #tpu.memory_space<vmem>>, vector<1x32x32xbf16>
    %207 = vector.shape_cast %206 : vector<1x32x32xbf16> to vector<32x32xbf16>
    %cst_89 = arith.constant dense<0.000000e+00> : vector<8x32xf32>
    %208 = tpu.matmul %205, %207, %cst_89 {dimension_numbers = #tpu.dot_dimension_numbers<[1], [0], [0], [1], [0, 0, 1, 1], [], []>} : vector<8x32xbf16>, vector<32x32xbf16>, vector<8x32xf32> -> vector<8x32xf32>
    %c1_90 = arith.constant 1 : index
    %c0_91 = arith.constant 0 : index
    %c0_92 = arith.constant 0 : index
    %209 = vector.load %arg7[%c1_90, %c0_91, %c0_92] : memref<2x1x32xf32, #tpu.memory_space<vmem>>, vector<1x1x32xf32>
    %210 = vector.shape_cast %209 : vector<1x1x32xf32> to vector<1x32xf32>
    %211 = vector.broadcast %210 : vector<1x32xf32> to vector<8x32xf32>
    %212 = arith.addf %208, %211 : vector<8x32xf32>
    %213 = arith.addf %212, %157 : vector<8x32xf32>
    %c1_93 = arith.constant 1 : index
    %c0_94 = arith.constant 0 : index
    %c0_95 = arith.constant 0 : index
    %214 = vector.load %arg8[%c1_93, %c0_94, %c0_95] : memref<2x1x32xf32, #tpu.memory_space<vmem>>, vector<1x1x32xf32>
    %215 = vector.shape_cast %214 : vector<1x1x32xf32> to vector<1x32xf32>
    %c1_96 = arith.constant 1 : index
    %c0_97 = arith.constant 0 : index
    %c0_98 = arith.constant 0 : index
    %216 = vector.load %arg9[%c1_96, %c0_97, %c0_98] : memref<2x1x32xf32, #tpu.memory_space<vmem>>, vector<1x1x32xf32>
    %217 = vector.shape_cast %216 : vector<1x1x32xf32> to vector<1x32xf32>
    %cst_99 = arith.constant dense<0.000000e+00> : vector<8xf32>
    %218 = vector.multi_reduction <add>, %213, %cst_99 [1] : vector<8x32xf32> to vector<8xf32>
    %219 = vector.shape_cast %218 : vector<8xf32> to vector<8x1xf32>
    %cst_100 = arith.constant 3.200000e+01 : f32
    %220 = vector.broadcast %cst_100 : f32 to vector<8x1xf32>
    %221 = arith.divf %219, %220 : vector<8x1xf32>
    %222 = vector.broadcast %221 : vector<8x1xf32> to vector<8x32xf32>
    %223 = arith.subf %213, %222 : vector<8x32xf32>
    %224 = arith.mulf %223, %223 : vector<8x32xf32>
    %cst_101 = arith.constant dense<0.000000e+00> : vector<8xf32>
    %225 = vector.multi_reduction <add>, %224, %cst_101 [1] : vector<8x32xf32> to vector<8xf32>
    %226 = vector.shape_cast %225 : vector<8xf32> to vector<8x1xf32>
    %cst_102 = arith.constant 3.200000e+01 : f32
    %227 = vector.broadcast %cst_102 : f32 to vector<8x1xf32>
    %228 = arith.divf %226, %227 : vector<8x1xf32>
    %cst_103 = arith.constant 9.99999996E-13 : f32
    %229 = vector.broadcast %cst_103 : f32 to vector<8x1xf32>
    %230 = arith.addf %228, %229 : vector<8x1xf32>
    %231 = math.rsqrt %230 : vector<8x1xf32>
    %232 = vector.broadcast %231 : vector<8x1xf32> to vector<8x32xf32>
    %233 = arith.mulf %223, %232 : vector<8x32xf32>
    %234 = vector.broadcast %215 : vector<1x32xf32> to vector<8x32xf32>
    %235 = arith.mulf %233, %234 : vector<8x32xf32>
    %236 = vector.broadcast %217 : vector<1x32xf32> to vector<8x32xf32>
    %237 = arith.addf %235, %236 : vector<8x32xf32>
    %238 = arith.truncf %237 : vector<8x32xf32> to vector<8x32xbf16>
    %c1_104 = arith.constant 1 : index
    %c0_105 = arith.constant 0 : index
    %c0_106 = arith.constant 0 : index
    %239 = vector.load %arg10[%c1_104, %c0_105, %c0_106] : memref<2x32x64xbf16, #tpu.memory_space<vmem>>, vector<1x32x64xbf16>
    %240 = vector.shape_cast %239 : vector<1x32x64xbf16> to vector<32x64xbf16>
    %cst_107 = arith.constant dense<0.000000e+00> : vector<8x64xf32>
    %241 = tpu.matmul %238, %240, %cst_107 {dimension_numbers = #tpu.dot_dimension_numbers<[1], [0], [0], [1], [0, 0, 1, 1], [], []>} : vector<8x32xbf16>, vector<32x64xbf16>, vector<8x64xf32> -> vector<8x64xf32>
    %c1_108 = arith.constant 1 : index
    %c0_109 = arith.constant 0 : index
    %c0_110 = arith.constant 0 : index
    %242 = vector.load %arg11[%c1_108, %c0_109, %c0_110] : memref<2x1x64xf32, #tpu.memory_space<vmem>>, vector<1x1x64xf32>
    %243 = vector.shape_cast %242 : vector<1x1x64xf32> to vector<1x64xf32>
    %244 = vector.broadcast %243 : vector<1x64xf32> to vector<8x64xf32>
    %245 = arith.addf %241, %244 : vector<8x64xf32>
    %cst_111 = arith.constant 5.000000e-01 : f32
    %246 = vector.broadcast %cst_111 : f32 to vector<8x64xf32>
    %247 = arith.mulf %246, %245 : vector<8x64xf32>
    %cst_112 = arith.constant 4.471500e-02 : f32
    %248 = vector.broadcast %cst_112 : f32 to vector<8x64xf32>
    %249 = arith.mulf %248, %245 : vector<8x64xf32>
    %250 = arith.mulf %249, %245 : vector<8x64xf32>
    %251 = arith.mulf %250, %245 : vector<8x64xf32>
    %252 = arith.addf %245, %251 : vector<8x64xf32>
    %cst_113 = arith.constant 0.797884583 : f32
    %253 = vector.broadcast %cst_113 : f32 to vector<8x64xf32>
    %254 = arith.mulf %253, %252 : vector<8x64xf32>
    %255 = math.tanh %254 : vector<8x64xf32>
    %cst_114 = arith.constant 1.000000e+00 : f32
    %256 = vector.broadcast %cst_114 : f32 to vector<8x64xf32>
    %257 = arith.addf %256, %255 : vector<8x64xf32>
    %258 = arith.mulf %247, %257 : vector<8x64xf32>
    %259 = arith.truncf %258 : vector<8x64xf32> to vector<8x64xbf16>
    %c1_115 = arith.constant 1 : index
    %c0_116 = arith.constant 0 : index
    %c0_117 = arith.constant 0 : index
    %260 = vector.load %arg12[%c1_115, %c0_116, %c0_117] : memref<2x64x32xbf16, #tpu.memory_space<vmem>>, vector<1x64x32xbf16>
    %261 = vector.shape_cast %260 : vector<1x64x32xbf16> to vector<64x32xbf16>
    %cst_118 = arith.constant dense<0.000000e+00> : vector<8x32xf32>
    %262 = tpu.matmul %259, %261, %cst_118 {dimension_numbers = #tpu.dot_dimension_numbers<[1], [0], [0], [1], [0, 0, 1, 1], [], []>} : vector<8x64xbf16>, vector<64x32xbf16>, vector<8x32xf32> -> vector<8x32xf32>
    %c1_119 = arith.constant 1 : index
    %c0_120 = arith.constant 0 : index
    %c0_121 = arith.constant 0 : index
    %263 = vector.load %arg13[%c1_119, %c0_120, %c0_121] : memref<2x1x32xf32, #tpu.memory_space<vmem>>, vector<1x1x32xf32>
    %264 = vector.shape_cast %263 : vector<1x1x32xf32> to vector<1x32xf32>
    %265 = vector.broadcast %264 : vector<1x32xf32> to vector<8x32xf32>
    %266 = arith.addf %262, %265 : vector<8x32xf32>
    %267 = arith.addf %266, %237 : vector<8x32xf32>
    %c1_122 = arith.constant 1 : index
    %c0_123 = arith.constant 0 : index
    %c0_124 = arith.constant 0 : index
    %268 = vector.load %arg14[%c1_122, %c0_123, %c0_124] : memref<2x1x32xf32, #tpu.memory_space<vmem>>, vector<1x1x32xf32>
    %269 = vector.shape_cast %268 : vector<1x1x32xf32> to vector<1x32xf32>
    %c1_125 = arith.constant 1 : index
    %c0_126 = arith.constant 0 : index
    %c0_127 = arith.constant 0 : index
    %270 = vector.load %arg15[%c1_125, %c0_126, %c0_127] : memref<2x1x32xf32, #tpu.memory_space<vmem>>, vector<1x1x32xf32>
    %271 = vector.shape_cast %270 : vector<1x1x32xf32> to vector<1x32xf32>
    %cst_128 = arith.constant dense<0.000000e+00> : vector<8xf32>
    %272 = vector.multi_reduction <add>, %267, %cst_128 [1] : vector<8x32xf32> to vector<8xf32>
    %273 = vector.shape_cast %272 : vector<8xf32> to vector<8x1xf32>
    %cst_129 = arith.constant 3.200000e+01 : f32
    %274 = vector.broadcast %cst_129 : f32 to vector<8x1xf32>
    %275 = arith.divf %273, %274 : vector<8x1xf32>
    %276 = vector.broadcast %275 : vector<8x1xf32> to vector<8x32xf32>
    %277 = arith.subf %267, %276 : vector<8x32xf32>
    %278 = arith.mulf %277, %277 : vector<8x32xf32>
    %cst_130 = arith.constant dense<0.000000e+00> : vector<8xf32>
    %279 = vector.multi_reduction <add>, %278, %cst_130 [1] : vector<8x32xf32> to vector<8xf32>
    %280 = vector.shape_cast %279 : vector<8xf32> to vector<8x1xf32>
    %cst_131 = arith.constant 3.200000e+01 : f32
    %281 = vector.broadcast %cst_131 : f32 to vector<8x1xf32>
    %282 = arith.divf %280, %281 : vector<8x1xf32>
    %cst_132 = arith.constant 9.99999996E-13 : f32
    %283 = vector.broadcast %cst_132 : f32 to vector<8x1xf32>
    %284 = arith.addf %282, %283 : vector<8x1xf32>
    %285 = math.rsqrt %284 : vector<8x1xf32>
    %286 = vector.broadcast %285 : vector<8x1xf32> to vector<8x32xf32>
    %287 = arith.mulf %277, %286 : vector<8x32xf32>
    %288 = vector.broadcast %269 : vector<1x32xf32> to vector<8x32xf32>
    %289 = arith.mulf %287, %288 : vector<8x32xf32>
    %290 = vector.broadcast %271 : vector<1x32xf32> to vector<8x32xf32>
    %291 = arith.addf %289, %290 : vector<8x32xf32>
    %292 = vector.extract_strided_slice %291 {offsets = [0, 0], sizes = [1, 32], strides = [1, 1]} : vector<8x32xf32> to vector<1x32xf32>
    %293 = arith.truncf %292 : vector<1x32xf32> to vector<1x32xbf16>
    %c0_133 = arith.constant 0 : index
    %c0_134 = arith.constant 0 : index
    %294 = vector.load %arg16[%c0_133, %c0_134] : memref<32x32xbf16, #tpu.memory_space<vmem>>, vector<32x32xbf16>
    %cst_135 = arith.constant dense<0.000000e+00> : vector<1x32xf32>
    %295 = tpu.matmul %293, %294, %cst_135 {dimension_numbers = #tpu.dot_dimension_numbers<[1], [0], [0], [1], [0, 0, 1, 1], [], []>} : vector<1x32xbf16>, vector<32x32xbf16>, vector<1x32xf32> -> vector<1x32xf32>
    %c0_136 = arith.constant 0 : index
    %c0_137 = arith.constant 0 : index
    %296 = vector.load %arg17[%c0_136, %c0_137] : memref<1x32xf32, #tpu.memory_space<vmem>>, vector<1x32xf32>
    %297 = arith.addf %295, %296 : vector<1x32xf32>
    %298 = math.tanh %297 : vector<1x32xf32>
    %299 = arith.truncf %298 : vector<1x32xf32> to vector<1x32xbf16>
    %c0_138 = arith.constant 0 : index
    %c0_139 = arith.constant 0 : index
    %300 = vector.load %arg18[%c0_138, %c0_139] : memref<32x128xbf16, #tpu.memory_space<vmem>>, vector<32x128xbf16>
    %cst_140 = arith.constant dense<0.000000e+00> : vector<1x128xf32>
    %301 = tpu.matmul %299, %300, %cst_140 {dimension_numbers = #tpu.dot_dimension_numbers<[1], [0], [0], [1], [0, 0, 1, 1], [], []>} : vector<1x32xbf16>, vector<32x128xbf16>, vector<1x128xf32> -> vector<1x128xf32>
    %c0_141 = arith.constant 0 : index
    %c0_142 = arith.constant 0 : index
    %302 = vector.load %arg19[%c0_141, %c0_142] : memref<1x128xf32, #tpu.memory_space<vmem>>, vector<1x128xf32>
    %303 = arith.addf %301, %302 : vector<1x128xf32>
    %304 = vector.shape_cast %303 : vector<1x128xf32> to vector<1x1x128xf32>
    %c0_143 = arith.constant 0 : index
    %c0_144 = arith.constant 0 : index
    %c0_145 = arith.constant 0 : index
    %305 = vector.load %arg20[%c0_143, %c0_144, %c0_145] : memref<1x1x128xf32, #tpu.memory_space<vmem>>, vector<1x1x128xf32>
    tpu.vector_store %arg20[%c0_143, %c0_144, %c0_145], %304 {strides = array<i32>} : memref<1x1x128xf32, #tpu.memory_space<vmem>>, vector<1x1x128xf32>,
    return
  }
  func.func @transform_0(%arg0: i32) -> (i32, i32, i32) {
    %c0_i32 = arith.constant 0 : i32
    %c0_i32_0 = arith.constant 0 : i32
    %c0_i32_1 = arith.constant 0 : i32
    return %arg0, %c0_i32, %c0_i32_0 : i32, i32, i32
  }
  func.func @transform_1(%arg0: i32) -> (i32, i32) {
    %c0_i32 = arith.constant 0 : i32
    %c0_i32_0 = arith.constant 0 : i32
    %c0_i32_1 = arith.constant 0 : i32
    return %c0_i32, %c0_i32_0 : i32, i32
  }
  func.func @transform_2(%arg0: i32) -> (i32, i32) {
    %c0_i32 = arith.constant 0 : i32
    %c0_i32_0 = arith.constant 0 : i32
    %c0_i32_1 = arith.constant 0 : i32
    return %c0_i32, %c0_i32_0 : i32, i32
  }
  func.func @transform_3(%arg0: i32) -> (i32, i32, i32) {
    %c0_i32 = arith.constant 0 : i32
    %c0_i32_0 = arith.constant 0 : i32
    %c0_i32_1 = arith.constant 0 : i32
    %c0_i32_2 = arith.constant 0 : i32
    return %c0_i32, %c0_i32_0, %c0_i32_1 : i32, i32, i32
  }
  func.func @transform_4(%arg0: i32) -> (i32, i32, i32) {
    %c0_i32 = arith.constant 0 : i32
    %c0_i32_0 = arith.constant 0 : i32
    %c0_i32_1 = arith.constant 0 : i32
    %c0_i32_2 = arith.constant 0 : i32
    return %c0_i32, %c0_i32_0, %c0_i32_1 : i32, i32, i32
  }
  func.func @transform_5(%arg0: i32) -> (i32, i32, i32) {
    %c0_i32 = arith.constant 0 : i32
    %c0_i32_0 = arith.constant 0 : i32
    %c0_i32_1 = arith.constant 0 : i32
    %c0_i32_2 = arith.constant 0 : i32
    return %c0_i32, %c0_i32_0, %c0_i32_1 : i32, i32, i32
  }
  func.func @transform_6(%arg0: i32) -> (i32, i32, i32) {
    %c0_i32 = arith.constant 0 : i32
    %c0_i32_0 = arith.constant 0 : i32
    %c0_i32_1 = arith.constant 0 : i32
    %c0_i32_2 = arith.constant 0 : i32
    return %c0_i32, %c0_i32_0, %c0_i32_1 : i32, i32, i32
  }
  func.func @transform_7(%arg0: i32) -> (i32, i32, i32) {
    %c0_i32 = arith.constant 0 : i32
    %c0_i32_0 = arith.constant 0 : i32
    %c0_i32_1 = arith.constant 0 : i32
    %c0_i32_2 = arith.constant 0 : i32
    return %c0_i32, %c0_i32_0, %c0_i32_1 : i32, i32, i32
  }
  func.func @transform_8(%arg0: i32) -> (i32, i32, i32) {
    %c0_i32 = arith.constant 0 : i32
    %c0_i32_0 = arith.constant 0 : i32
    %c0_i32_1 = arith.constant 0 : i32
    %c0_i32_2 = arith.constant 0 : i32
    return %c0_i32, %c0_i32_0, %c0_i32_1 : i32, i32, i32
  }
  func.func @transform_9(%arg0: i32) -> (i32, i32, i32) {
    %c0_i32 = arith.constant 0 : i32
    %c0_i32_0 = arith.constant 0 : i32
    %c0_i32_1 = arith.constant 0 : i32
    %c0_i32_2 = arith.constant 0 : i32
    return %c0_i32, %c0_i32_0, %c0_i32_1 : i32, i32, i32
  }
  func.func @transform_10(%arg0: i32) -> (i32, i32, i32) {
    %c0_i32 = arith.constant 0 : i32
    %c0_i32_0 = arith.constant 0 : i32
    %c0_i32_1 = arith.constant 0 : i32
    %c0_i32_2 = arith.constant 0 : i32
    return %c0_i32, %c0_i32_0, %c0_i32_1 : i32, i32, i32
  }
  func.func @transform_11(%arg0: i32) -> (i32, i32, i32) {
    %c0_i32 = arith.constant 0 : i32
    %c0_i32_0 = arith.constant 0 : i32
    %c0_i32_1 = arith.constant 0 : i32
    %c0_i32_2 = arith.constant 0 : i32
    return %c0_i32, %c0_i32_0, %c0_i32_1 : i32, i32, i32
  }
  func.func @transform_12(%arg0: i32) -> (i32, i32, i32) {
    %c0_i32 = arith.constant 0 : i32
    %c0_i32_0 = arith.constant 0 : i32
    %c0_i32_1 = arith.constant 0 : i32
    %c0_i32_2 = arith.constant 0 : i32
    return %c0_i32, %c0_i32_0, %c0_i32_1 : i32, i32, i32
  }
  func.func @transform_13(%arg0: i32) -> (i32, i32, i32) {
    %c0_i32 = arith.constant 0 : i32
    %c0_i32_0 = arith.constant 0 : i32
    %c0_i32_1 = arith.constant 0 : i32
    %c0_i32_2 = arith.constant 0 : i32
    return %c0_i32, %c0_i32_0, %c0_i32_1 : i32, i32, i32
  }
  func.func @transform_14(%arg0: i32) -> (i32, i32, i32) {
    %c0_i32 = arith.constant 0 : i32
    %c0_i32_0 = arith.constant 0 : i32
    %c0_i32_1 = arith.constant 0 : i32
    %c0_i32_2 = arith.constant 0 : i32
    return %c0_i32, %c0_i32_0, %c0_i32_1 : i32, i32, i32
  }
  func.func @transform_15(%arg0: i32) -> (i32, i32) {
    %c0_i32 = arith.constant 0 : i32
    %c0_i32_0 = arith.constant 0 : i32
    %c0_i32_1 = arith.constant 0 : i32
    return %c0_i32, %c0_i32_0 : i32, i32
  }
  func.func @transform_16(%arg0: i32) -> (i32, i32) {
    %c0_i32 = arith.constant 0 : i32
    %c0_i32_0 = arith.constant 0 : i32
    %c0_i32_1 = arith.constant 0 : i32
    return %c0_i32, %c0_i32_0 : i32, i32
  }
  func.func @transform_17(%arg0: i32) -> (i32, i32) {
    %c0_i32 = arith.constant 0 : i32
    %c0_i32_0 = arith.constant 0 : i32
    %c0_i32_1 = arith.constant 0 : i32
    return %c0_i32, %c0_i32_0 : i32, i32
  }
  func.func @transform_18(%arg0: i32) -> (i32, i32) {
    %c0_i32 = arith.constant 0 : i32
    %c0_i32_0 = arith.constant 0 : i32
    %c0_i32_1 = arith.constant 0 : i32
    return %c0_i32, %c0_i32_0 : i32, i32
  }
  func.func @transform_19(%arg0: i32) -> (i32, i32, i32) {
    %c0_i32 = arith.constant 0 : i32
    %c0_i32_0 = arith.constant 0 : i32
    %c0_i32_1 = arith.constant 0 : i32
    return %arg0, %c0_i32, %c0_i32_0 : i32, i32, i32
  }
}

</mosaic_0001>

<llo_original>
// kernel: bert_encoder_forward.1
$region0: #{bert_encoder_forward.1}
  #allocation0 [shape = 'u32[]', space=smem, size = 0x4, offset = 0x4, fixed_abs, tag = 'smem constant byte address 0x4 - core index']
  #allocation1 [shape = 'u32[144,128]{1,0:T(1,128)}', space=vmem, size = 0x12000, scoped, tag = 'internal scratch']
  %s0 = inlined_call_operand.vmem [shape: f32[2,8,32], index: 0, kind: input, shape index: {}]
  %s1 = inlined_call_operand.vmem [shape: f32[1,32], index: 1, kind: input, shape index: {}]
  %s2 = inlined_call_operand.vmem [shape: f32[1,32], index: 2, kind: input, shape index: {}]
  %s3 = inlined_call_operand.vmem [shape: bf16[2,32,96], index: 3, kind: input, shape index: {}]
  %s4 = inlined_call_operand.vmem [shape: f32[2,1,96], index: 4, kind: input, shape index: {}]
  %s5 = inlined_call_operand.vmem [shape: bf16[2,32,32], index: 5, kind: input, shape index: {}]
  %s6 = inlined_call_operand.vmem [shape: f32[2,1,32], index: 6, kind: input, shape index: {}]
  %s7 = inlined_call_operand.vmem [shape: f32[2,1,32], index: 7, kind: input, shape index: {}]
  %s8 = inlined_call_operand.vmem [shape: f32[2,1,32], index: 8, kind: input, shape index: {}]
  %s9 = inlined_call_operand.vmem [shape: bf16[2,32,64], index: 9, kind: input, shape index: {}]
  %s10 = inlined_call_operand.vmem [shape: f32[2,1,64], index: 10, kind: input, shape index: {}]
  %s11 = inlined_call_operand.vmem [shape: bf16[2,64,32], index: 11, kind: input, shape index: {}]
  %s12 = inlined_call_operand.vmem [shape: f32[2,1,32], index: 12, kind: input, shape index: {}]
  %s13 = inlined_call_operand.vmem [shape: f32[2,1,32], index: 13, kind: input, shape index: {}]
  %s14 = inlined_call_operand.vmem [shape: f32[2,1,32], index: 14, kind: input, shape index: {}]
  %s15 = inlined_call_operand.vmem [shape: bf16[32,32], index: 15, kind: input, shape index: {}]
  %s16 = inlined_call_operand.vmem [shape: f32[1,32], index: 16, kind: input, shape index: {}]
  %s17 = inlined_call_operand.vmem [shape: bf16[32,128], index: 17, kind: input, shape index: {}]
  %s18 = inlined_call_operand.vmem [shape: f32[1,128], index: 18, kind: input, shape index: {}]
  %s19 = inlined_call_operand.hbm [shape: f32[2,1,128], index: 19, kind: output, shape index: {}]
  %s20 = sld [smem:[#allocation0]]
  $region109: #{bert_encoder_forward.1} parent=0
    _
  %s22 = ssub.s32 1, %s20
  %s23 = scalar_select 0, %s22, %s20
  $region1: #{bert_encoder_forward.1} parent=0
    #allocation2 [shape = 'u8[1024]{0}', space=vmem, size = 0x400, scoped, tag = 'output window, operand 0']
    #allocation3 [shape = 's32[2]{0}', space=sflag, size = 0x8, scoped, tag = 'scoped memory for bert_encoder_forward.1']
    %24 = vsyncpa [#allocation3], 0
    %s25 = scalar_lea.sflag [#allocation3], 1
    %26 = vsyncpa %s25, 0
    loop: start=0, step=1, limit=4
    $region2: #{bert_encoder_forward.1} parent=1 // loop_pre_header
      _
    $region3: #{bert_encoder_forward.1} parent=1 // loop_header
      %s28 = sphi 0, %s32
      %p29 = scmp.ge.s32.totalorder %s28, 4
      %s38 = sphi 0, %s40
      %s41 = sphi 0, %s38
      %s42 = sphi 0, %s41
      %s58 = sphi 0, %s42
      %s62 = sphi 0, %s62
      %s64 = sphi 0, %s62
      %s65 = sphi 0, %s64
      %s79 = sphi 0, %s65
      %s83 = sphi 0, %s83
      %s85 = sphi 0, %s83
      %s86 = sphi 0, %s85
      %s100 = sphi 0, %s86
      %s104 = sphi 0, %s104
      %s106 = sphi 0, %s104
      %s107 = sphi 0, %s106
      %s121 = sphi 0, %s107
      %s125 = sphi 0, %s125
      %s127 = sphi 0, %s125
      %s128 = sphi 0, %s127
      %s142 = sphi 0, %s128
      %s146 = sphi 0, %s146
      %s148 = sphi 0, %s146
      %s149 = sphi 0, %s148
      %s163 = sphi 0, %s149
      %s167 = sphi 0, %s167
      %s169 = sphi 0, %s167
      %s170 = sphi 0, %s169
      %s184 = sphi 0, %s170
      %s188 = sphi 0, %s188
      %s190 = sphi 0, %s188
      %s191 = sphi 0, %s190
      %s205 = sphi 0, %s191
      %s209 = sphi 0, %s209
      %s211 = sphi 0, %s209
      %s212 = sphi 0, %s211
      %s226 = sphi 0, %s212
      %s230 = sphi 0, %s230
      %s232 = sphi 0, %s230
      %s233 = sphi 0, %s232
      %s247 = sphi 0, %s233
      %s251 = sphi 0, %s251
      %s253 = sphi 0, %s251
      %s254 = sphi 0, %s253
      %s268 = sphi 0, %s254
      %s272 = sphi 0, %s272
      %s274 = sphi 0, %s272
      %s275 = sphi 0, %s274
      %s289 = sphi 0, %s275
      %s293 = sphi 0, %s293
      %s295 = sphi 0, %s293
      %s296 = sphi 0, %s295
      %s310 = sphi 0, %s296
      %s314 = sphi 0, %s314
      %s316 = sphi 0, %s314
      %s317 = sphi 0, %s316
      %s331 = sphi 0, %s317
      %s335 = sphi 0, %s335
      %s337 = sphi 0, %s335
      %s338 = sphi 0, %s337
      %s352 = sphi 0, %s338
      %s356 = sphi 0, %s356
      %s358 = sphi 0, %s356
      %s359 = sphi 0, %s358
      %s373 = sphi 0, %s359
      %s377 = sphi 0, %s377
      %s379 = sphi 0, %s377
      %s380 = sphi 0, %s379
      %s394 = sphi 0, %s380
      %s398 = sphi 0, %s398
      %s400 = sphi 0, %s398
      %s401 = sphi 0, %s400
      %s415 = sphi 0, %s401
      %s419 = sphi 0, %s419
      %s421 = sphi 0, %s419
      %s422 = sphi 0, %s421
      %s436 = sphi 0, %s422
      %s442 = sphi 0, %s444
      %s445 = sphi 0, %s442
      %s446 = sphi 0, %s445
      %s462 = sphi 0, %s446
    $region4: #{bert_encoder_forward.1} parent=1 // loop_header_branch
      %31 = sbr.rel (%p29) target = $region8
    $region5: #{bert_encoder_forward.1} parent=1 // loop_body
      %s33 = ssub.s32 %s28, 1
      %s34 = ssub.s32 %s28, 2
      %s35 = sadd.s32 %s28, 1
      %s36 = ssub.s32 %s28, %s35
      %p37 = scmp.eq.s32.totalorder %s36, 0
      %s39 = sadd.s32 %s38, 1
      %s40 = scalar_select %p37, %s38, %s39
      %p43 = pneg %p37
      %p44 = scmp.eq.s32.totalorder %s28, 1
      %p45 = por %p43, %p44
      %p46 = scmp.ne.s32.totalorder %s38, %s41
      %p47 = scmp.eq.s32.totalorder %s28, 0
      %p48 = por %p46, %p47
      %p49 = scmp.ne.s32.totalorder %s38, %s41
      %p50 = scmp.eq.s32.totalorder %s33, 1
      %p51 = por %p49, %p50
      %p52 = scmp.ne.s32.totalorder %s41, %s42
      %p53 = scmp.eq.s32.totalorder %s33, 0
      %p54 = por %p52, %p53
      %p55 = scmp.ne.s32.totalorder %s41, %s42
      %p56 = scmp.eq.s32.totalorder %s34, 1
      %p57 = por %p55, %p56
      %p59 = scmp.ne.s32.totalorder %s42, %s58
      %p60 = scmp.eq.s32.totalorder %s34, 0
      %p61 = por %p59, %p60
      %s63 = sadd.s32 %s62, 1
      %p66 = scmp.eq.s32.totalorder %s28, 1
      %p67 = scmp.ne.s32.totalorder %s62, %s64
      %p68 = scmp.eq.s32.totalorder %s28, 0
      %p69 = por %p67, %p68
      %p70 = scmp.ne.s32.totalorder %s62, %s64
      %p71 = scmp.eq.s32.totalorder %s33, 1
      %p72 = por %p70, %p71
      %p73 = scmp.ne.s32.totalorder %s64, %s65
      %p74 = scmp.eq.s32.totalorder %s33, 0
      %p75 = por %p73, %p74
      %p76 = scmp.ne.s32.totalorder %s64, %s65
      %p77 = scmp.eq.s32.totalorder %s34, 1
      %p78 = por %p76, %p77
      %p80 = scmp.ne.s32.totalorder %s65, %s79
      %p81 = scmp.eq.s32.totalorder %s34, 0
      %p82 = por %p80, %p81
      %s84 = sadd.s32 %s83, 1
      %p87 = scmp.eq.s32.totalorder %s28, 1
      %p88 = scmp.ne.s32.totalorder %s83, %s85
      %p89 = scmp.eq.s32.totalorder %s28, 0
      %p90 = por %p88, %p89
      %p91 = scmp.ne.s32.totalorder %s83, %s85
      %p92 = scmp.eq.s32.totalorder %s33, 1
      %p93 = por %p91, %p92
      %p94 = scmp.ne.s32.totalorder %s85, %s86
      %p95 = scmp.eq.s32.totalorder %s33, 0
      %p96 = por %p94, %p95
      %p97 = scmp.ne.s32.totalorder %s85, %s86
      %p98 = scmp.eq.s32.totalorder %s34, 1
      %p99 = por %p97, %p98
      %p101 = scmp.ne.s32.totalorder %s86, %s100
      %p102 = scmp.eq.s32.totalorder %s34, 0
      %p103 = por %p101, %p102
      %s105 = sadd.s32 %s104, 1
      %p108 = scmp.eq.s32.totalorder %s28, 1
      %p109 = scmp.ne.s32.totalorder %s104, %s106
      %p110 = scmp.eq.s32.totalorder %s28, 0
      %p111 = por %p109, %p110
      %p112 = scmp.ne.s32.totalorder %s104, %s106
      %p113 = scmp.eq.s32.totalorder %s33, 1
      %p114 = por %p112, %p113
      %p115 = scmp.ne.s32.totalorder %s106, %s107
      %p116 = scmp.eq.s32.totalorder %s33, 0
      %p117 = por %p115, %p116
      %p118 = scmp.ne.s32.totalorder %s106, %s107
      %p119 = scmp.eq.s32.totalorder %s34, 1
      %p120 = por %p118, %p119
      %p122 = scmp.ne.s32.totalorder %s107, %s121
      %p123 = scmp.eq.s32.totalorder %s34, 0
      %p124 = por %p122, %p123
      %s126 = sadd.s32 %s125, 1
      %p129 = scmp.eq.s32.totalorder %s28, 1
      %p130 = scmp.ne.s32.totalorder %s125, %s127
      %p131 = scmp.eq.s32.totalorder %s28, 0
      %p132 = por %p130, %p131
      %p133 = scmp.ne.s32.totalorder %s125, %s127
      %p134 = scmp.eq.s32.totalorder %s33, 1
      %p135 = por %p133, %p134
      %p136 = scmp.ne.s32.totalorder %s127, %s128
      %p137 = scmp.eq.s32.totalorder %s33, 0
      %p138 = por %p136, %p137
      %p139 = scmp.ne.s32.totalorder %s127, %s128
      %p140 = scmp.eq.s32.totalorder %s34, 1
      %p141 = por %p139, %p140
      %p143 = scmp.ne.s32.totalorder %s128, %s142
      %p144 = scmp.eq.s32.totalorder %s34, 0
      %p145 = por %p143, %p144
      %s147 = sadd.s32 %s146, 1
      %p150 = scmp.eq.s32.totalorder %s28, 1
      %p151 = scmp.ne.s32.totalorder %s146, %s148
      %p152 = scmp.eq.s32.totalorder %s28, 0
      %p153 = por %p151, %p152
      %p154 = scmp.ne.s32.totalorder %s146, %s148
      %p155 = scmp.eq.s32.totalorder %s33, 1
      %p156 = por %p154, %p155
      %p157 = scmp.ne.s32.totalorder %s148, %s149
      %p158 = scmp.eq.s32.totalorder %s33, 0
      %p159 = por %p157, %p158
      %p160 = scmp.ne.s32.totalorder %s148, %s149
      %p161 = scmp.eq.s32.totalorder %s34, 1
      %p162 = por %p160, %p161
      %p164 = scmp.ne.s32.totalorder %s149, %s163
      %p165 = scmp.eq.s32.totalorder %s34, 0
      %p166 = por %p164, %p165
      %s168 = sadd.s32 %s167, 1
      %p171 = scmp.eq.s32.totalorder %s28, 1
      %p172 = scmp.ne.s32.totalorder %s167, %s169
      %p173 = scmp.eq.s32.totalorder %s28, 0
      %p174 = por %p172, %p173
      %p175 = scmp.ne.s32.totalorder %s167, %s169
      %p176 = scmp.eq.s32.totalorder %s33, 1
      %p177 = por %p175, %p176
      %p178 = scmp.ne.s32.totalorder %s169, %s170
      %p179 = scmp.eq.s32.totalorder %s33, 0
      %p180 = por %p178, %p179
      %p181 = scmp.ne.s32.totalorder %s169, %s170
      %p182 = scmp.eq.s32.totalorder %s34, 1
      %p183 = por %p181, %p182
      %p185 = scmp.ne.s32.totalorder %s170, %s184
      %p186 = scmp.eq.s32.totalorder %s34, 0
      %p187 = por %p185, %p186
      %s189 = sadd.s32 %s188, 1
      %p192 = scmp.eq.s32.totalorder %s28, 1
      %p193 = scmp.ne.s32.totalorder %s188, %s190
      %p194 = scmp.eq.s32.totalorder %s28, 0
      %p195 = por %p193, %p194
      %p196 = scmp.ne.s32.totalorder %s188, %s190
      %p197 = scmp.eq.s32.totalorder %s33, 1
      %p198 = por %p196, %p197
      %p199 = scmp.ne.s32.totalorder %s190, %s191
      %p200 = scmp.eq.s32.totalorder %s33, 0
      %p201 = por %p199, %p200
      %p202 = scmp.ne.s32.totalorder %s190, %s191
      %p203 = scmp.eq.s32.totalorder %s34, 1
      %p204 = por %p202, %p203
      %p206 = scmp.ne.s32.totalorder %s191, %s205
      %p207 = scmp.eq.s32.totalorder %s34, 0
      %p208 = por %p206, %p207
      %s210 = sadd.s32 %s209, 1
      %p213 = scmp.eq.s32.totalorder %s28, 1
      %p214 = scmp.ne.s32.totalorder %s209, %s211
      %p215 = scmp.eq.s32.totalorder %s28, 0
      %p216 = por %p214, %p215
      %p217 = scmp.ne.s32.totalorder %s209, %s211
      %p218 = scmp.eq.s32.totalorder %s33, 1
      %p219 = por %p217, %p218
      %p220 = scmp.ne.s32.totalorder %s211, %s212
      %p221 = scmp.eq.s32.totalorder %s33, 0
      %p222 = por %p220, %p221
      %p223 = scmp.ne.s32.totalorder %s211, %s212
      %p224 = scmp.eq.s32.totalorder %s34, 1
      %p225 = por %p223, %p224
      %p227 = scmp.ne.s32.totalorder %s212, %s226
      %p228 = scmp.eq.s32.totalorder %s34, 0
      %p229 = por %p227, %p228
      %s231 = sadd.s32 %s230, 1
      %p234 = scmp.eq.s32.totalorder %s28, 1
      %p235 = scmp.ne.s32.totalorder %s230, %s232
      %p236 = scmp.eq.s32.totalorder %s28, 0
      %p237 = por %p235, %p236
      %p238 = scmp.ne.s32.totalorder %s230, %s232
      %p239 = scmp.eq.s32.totalorder %s33, 1
      %p240 = por %p238, %p239
      %p241 = scmp.ne.s32.totalorder %s232, %s233
      %p242 = scmp.eq.s32.totalorder %s33, 0
      %p243 = por %p241, %p242
      %p244 = scmp.ne.s32.totalorder %s232, %s233
      %p245 = scmp.eq.s32.totalorder %s34, 1
      %p246 = por %p244, %p245
      %p248 = scmp.ne.s32.totalorder %s233, %s247
      %p249 = scmp.eq.s32.totalorder %s34, 0
      %p250 = por %p248, %p249
      %s252 = sadd.s32 %s251, 1
      %p255 = scmp.eq.s32.totalorder %s28, 1
      %p256 = scmp.ne.s32.totalorder %s251, %s253
      %p257 = scmp.eq.s32.totalorder %s28, 0
      %p258 = por %p256, %p257
      %p259 = scmp.ne.s32.totalorder %s251, %s253
      %p260 = scmp.eq.s32.totalorder %s33, 1
      %p261 = por %p259, %p260
      %p262 = scmp.ne.s32.totalorder %s253, %s254
      %p263 = scmp.eq.s32.totalorder %s33, 0
      %p264 = por %p262, %p263
      %p265 = scmp.ne.s32.totalorder %s253, %s254
      %p266 = scmp.eq.s32.totalorder %s34, 1
      %p267 = por %p265, %p266
      %p269 = scmp.ne.s32.totalorder %s254, %s268
      %p270 = scmp.eq.s32.totalorder %s34, 0
      %p271 = por %p269, %p270
      %s273 = sadd.s32 %s272, 1
      %p276 = scmp.eq.s32.totalorder %s28, 1
      %p277 = scmp.ne.s32.totalorder %s272, %s274
      %p278 = scmp.eq.s32.totalorder %s28, 0
      %p279 = por %p277, %p278
      %p280 = scmp.ne.s32.totalorder %s272, %s274
      %p281 = scmp.eq.s32.totalorder %s33, 1
      %p282 = por %p280, %p281
      %p283 = scmp.ne.s32.totalorder %s274, %s275
      %p284 = scmp.eq.s32.totalorder %s33, 0
      %p285 = por %p283, %p284
      %p286 = scmp.ne.s32.totalorder %s274, %s275
      %p287 = scmp.eq.s32.totalorder %s34, 1
      %p288 = por %p286, %p287
      %p290 = scmp.ne.s32.totalorder %s275, %s289
      %p291 = scmp.eq.s32.totalorder %s34, 0
      %p292 = por %p290, %p291
      %s294 = sadd.s32 %s293, 1
      %p297 = scmp.eq.s32.totalorder %s28, 1
      %p298 = scmp.ne.s32.totalorder %s293, %s295
      %p299 = scmp.eq.s32.totalorder %s28, 0
      %p300 = por %p298, %p299
      %p301 = scmp.ne.s32.totalorder %s293, %s295
      %p302 = scmp.eq.s32.totalorder %s33, 1
      %p303 = por %p301, %p302
      %p304 = scmp.ne.s32.totalorder %s295, %s296
      %p305 = scmp.eq.s32.totalorder %s33, 0
      %p306 = por %p304, %p305
      %p307 = scmp.ne.s32.totalorder %s295, %s296
      %p308 = scmp.eq.s32.totalorder %s34, 1
      %p309 = por %p307, %p308
      %p311 = scmp.ne.s32.totalorder %s296, %s310
      %p312 = scmp.eq.s32.totalorder %s34, 0
      %p313 = por %p311, %p312
      %s315 = sadd.s32 %s314, 1
      %p318 = scmp.eq.s32.totalorder %s28, 1
      %p319 = scmp.ne.s32.totalorder %s314, %s316
      %p320 = scmp.eq.s32.totalorder %s28, 0
      %p321 = por %p319, %p320
      %p322 = scmp.ne.s32.totalorder %s314, %s316
      %p323 = scmp.eq.s32.totalorder %s33, 1
      %p324 = por %p322, %p323
      %p325 = scmp.ne.s32.totalorder %s316, %s317
      %p326 = scmp.eq.s32.totalorder %s33, 0
      %p327 = por %p325, %p326
      %p328 = scmp.ne.s32.totalorder %s316, %s317
      %p329 = scmp.eq.s32.totalorder %s34, 1
      %p330 = por %p328, %p329
      %p332 = scmp.ne.s32.totalorder %s317, %s331
      %p333 = scmp.eq.s32.totalorder %s34, 0
      %p334 = por %p332, %p333
      %s336 = sadd.s32 %s335, 1
      %p339 = scmp.eq.s32.totalorder %s28, 1
      %p340 = scmp.ne.s32.totalorder %s335, %s337
      %p341 = scmp.eq.s32.totalorder %s28, 0
      %p342 = por %p340, %p341
      %p343 = scmp.ne.s32.totalorder %s335, %s337
      %p344 = scmp.eq.s32.totalorder %s33, 1
      %p345 = por %p343, %p344
      %p346 = scmp.ne.s32.totalorder %s337, %s338
      %p347 = scmp.eq.s32.totalorder %s33, 0
      %p348 = por %p346, %p347
      %p349 = scmp.ne.s32.totalorder %s337, %s338
      %p350 = scmp.eq.s32.totalorder %s34, 1
      %p351 = por %p349, %p350
      %p353 = scmp.ne.s32.totalorder %s338, %s352
      %p354 = scmp.eq.s32.totalorder %s34, 0
      %p355 = por %p353, %p354
      %s357 = sadd.s32 %s356, 1
      %p360 = scmp.eq.s32.totalorder %s28, 1
      %p361 = scmp.ne.s32.totalorder %s356, %s358
      %p362 = scmp.eq.s32.totalorder %s28, 0
      %p363 = por %p361, %p362
      %p364 = scmp.ne.s32.totalorder %s356, %s358
      %p365 = scmp.eq.s32.totalorder %s33, 1
      %p366 = por %p364, %p365
      %p367 = scmp.ne.s32.totalorder %s358, %s359
      %p368 = scmp.eq.s32.totalorder %s33, 0
      %p369 = por %p367, %p368
      %p370 = scmp.ne.s32.totalorder %s358, %s359
      %p371 = scmp.eq.s32.totalorder %s34, 1
      %p372 = por %p370, %p371
      %p374 = scmp.ne.s32.totalorder %s359, %s373
      %p375 = scmp.eq.s32.totalorder %s34, 0
      %p376 = por %p374, %p375
      %s378 = sadd.s32 %s377, 1
      %p381 = scmp.eq.s32.totalorder %s28, 1
      %p382 = scmp.ne.s32.totalorder %s377, %s379
      %p383 = scmp.eq.s32.totalorder %s28, 0
      %p384 = por %p382, %p383
      %p385 = scmp.ne.s32.totalorder %s377, %s379
      %p386 = scmp.eq.s32.totalorder %s33, 1
      %p387 = por %p385, %p386
      %p388 = scmp.ne.s32.totalorder %s379, %s380
      %p389 = scmp.eq.s32.totalorder %s33, 0
      %p390 = por %p388, %p389
      %p391 = scmp.ne.s32.totalorder %s379, %s380
      %p392 = scmp.eq.s32.totalorder %s34, 1
      %p393 = por %p391, %p392
      %p395 = scmp.ne.s32.totalorder %s380, %s394
      %p396 = scmp.eq.s32.totalorder %s34, 0
      %p397 = por %p395, %p396
      %s399 = sadd.s32 %s398, 1
      %p402 = scmp.eq.s32.totalorder %s28, 1
      %p403 = scmp.ne.s32.totalorder %s398, %s400
      %p404 = scmp.eq.s32.totalorder %s28, 0
      %p405 = por %p403, %p404
      %p406 = scmp.ne.s32.totalorder %s398, %s400
      %p407 = scmp.eq.s32.totalorder %s33, 1
      %p408 = por %p406, %p407
      %p409 = scmp.ne.s32.totalorder %s400, %s401
      %p410 = scmp.eq.s32.totalorder %s33, 0
      %p411 = por %p409, %p410
      %p412 = scmp.ne.s32.totalorder %s400, %s401
      %p413 = scmp.eq.s32.totalorder %s34, 1
      %p414 = por %p412, %p413
      %p416 = scmp.ne.s32.totalorder %s401, %s415
      %p417 = scmp.eq.s32.totalorder %s34, 0
      %p418 = por %p416, %p417
      %s420 = sadd.s32 %s419, 1
      %p423 = scmp.eq.s32.totalorder %s28, 1
      %p424 = scmp.ne.s32.totalorder %s419, %s421
      %p425 = scmp.eq.s32.totalorder %s28, 0
      %p426 = por %p424, %p425
      %p427 = scmp.ne.s32.totalorder %s419, %s421
      %p428 = scmp.eq.s32.totalorder %s33, 1
      %p429 = por %p427, %p428
      %p430 = scmp.ne.s32.totalorder %s421, %s422
      %p431 = scmp.eq.s32.totalorder %s33, 0
      %p432 = por %p430, %p431
      %p433 = scmp.ne.s32.totalorder %s421, %s422
      %p434 = scmp.eq.s32.totalorder %s34, 1
      %p435 = por %p433, %p434
      %p437 = scmp.ne.s32.totalorder %s422, %s436
      %p438 = scmp.eq.s32.totalorder %s34, 0
      %p439 = por %p437, %p438
      %s440 = ssub.s32 %s28, %s35
      %p441 = scmp.eq.s32.totalorder %s440, 0
      %s443 = sadd.s32 %s442, 1
      %s444 = scalar_select %p441, %s442, %s443
      %p447 = pneg %p441
      %p448 = scmp.eq.s32.totalorder %s28, 1
      %p449 = por %p447, %p448
      %p450 = scmp.ne.s32.totalorder %s442, %s445
      %p451 = scmp.eq.s32.totalorder %s28, 0
      %p452 = por %p450, %p451
      %p453 = scmp.ne.s32.totalorder %s442, %s445
      %p454 = scmp.eq.s32.totalorder %s33, 1
      %p455 = por %p453, %p454
      %p456 = scmp.ne.s32.totalorder %s445, %s446
      %p457 = scmp.eq.s32.totalorder %s33, 0
      %p458 = por %p456, %p457
      %p459 = scmp.ne.s32.totalorder %s445, %s446
      %p460 = scmp.eq.s32.totalorder %s34, 1
      %p461 = por %p459, %p460
      %p463 = scmp.ne.s32.totalorder %s446, %s462
      %p464 = scmp.eq.s32.totalorder %s34, 0
      %p465 = por %p463, %p464
      %p466 = scmp.le.s32.totalorder 1, %s28
      %p467 = scmp.lt.s32.totalorder %s28, 3
      %p468 = pnand %p466, %p467
      %p469 = pneg %p468
      // Predicated region
      $region9: #{bert_encoder_forward.1} parent=5 // pred_check
        _
      $region10: #{bert_encoder_forward.1} parent=5 // pred_check_branch
        %471 = sbr.rel (%p468) target = $region12
      $region11: #{bert_encoder_forward.1} parent=5 // pred_region
        %s472 = ssub.s32 %s28, 1
        // Predicated region
        $region13: #{bert_encoder_forward.1} parent=11 // pred_check
          %p473 = pneg %p75
        $region14: #{bert_encoder_forward.1} parent=11 // pred_check_branch
          %475 = sbr.rel (%p473) target = $region16
        $region15: #{bert_encoder_forward.1} parent=11 // pred_region
          _
        $region16: #{bert_encoder_forward.1} parent=11 // pred_fallthru
          _
        // Predicated region
        $region17: #{bert_encoder_forward.1} parent=11 // pred_check
          %p476 = pneg %p96
        $region18: #{bert_encoder_forward.1} parent=11 // pred_check_branch
          %478 = sbr.rel (%p476) target = $region20
        $region19: #{bert_encoder_forward.1} parent=11 // pred_region
          _
        $region20: #{bert_encoder_forward.1} parent=11 // pred_fallthru
          _
        // Predicated region
        $region21: #{bert_encoder_forward.1} parent=11 // pred_check
          %p479 = pneg %p117
        $region22: #{bert_encoder_forward.1} parent=11 // pred_check_branch
          %481 = sbr.rel (%p479) target = $region24
        $region23: #{bert_encoder_forward.1} parent=11 // pred_region
          _
        $region24: #{bert_encoder_forward.1} parent=11 // pred_fallthru
          _
        // Predicated region
        $region25: #{bert_encoder_forward.1} parent=11 // pred_check
          %p482 = pneg %p138
        $region26: #{bert_encoder_forward.1} parent=11 // pred_check_branch
          %484 = sbr.rel (%p482) target = $region28
        $region27: #{bert_encoder_forward.1} parent=11 // pred_region
          _
        $region28: #{bert_encoder_forward.1} parent=11 // pred_fallthru
          _
        // Predicated region
        $region29: #{bert_encoder_forward.1} parent=11 // pred_check
          %p485 = pneg %p159
        $region30: #{bert_encoder_forward.1} parent=11 // pred_check_branch
          %487 = sbr.rel (%p485) target = $region32
        $region31: #{bert_encoder_forward.1} parent=11 // pred_region
          _
        $region32: #{bert_encoder_forward.1} parent=11 // pred_fallthru
          _
        // Predicated region
        $region33: #{bert_encoder_forward.1} parent=11 // pred_check
          %p488 = pneg %p180
        $region34: #{bert_encoder_forward.1} parent=11 // pred_check_branch
          %490 = sbr.rel (%p488) target = $region36
        $region35: #{bert_encoder_forward.1} parent=11 // pred_region
          _
        $region36: #{bert_encoder_forward.1} parent=11 // pred_fallthru
          _
        // Predicated region
        $region37: #{bert_encoder_forward.1} parent=11 // pred_check
          %p491 = pneg %p201
        $region38: #{bert_encoder_forward.1} parent=11 // pred_check_branch
          %493 = sbr.rel (%p491) target = $region40
        $region39: #{bert_encoder_forward.1} parent=11 // pred_region
          _
        $region40: #{bert_encoder_forward.1} parent=11 // pred_fallthru
          _
        // Predicated region
        $region41: #{bert_encoder_forward.1} parent=11 // pred_check
          %p494 = pneg %p222
        $region42: #{bert_encoder_forward.1} parent=11 // pred_check_branch
          %496 = sbr.rel (%p494) target = $region44
        $region43: #{bert_encoder_forward.1} parent=11 // pred_region
          _
        $region44: #{bert_encoder_forward.1} parent=11 // pred_fallthru
          _
        // Predicated region
        $region45: #{bert_encoder_forward.1} parent=11 // pred_check
          %p497 = pneg %p243
        $region46: #{bert_encoder_forward.1} parent=11 // pred_check_branch
          %499 = sbr.rel (%p497) target = $region48
        $region47: #{bert_encoder_forward.1} parent=11 // pred_region
          _
        $region48: #{bert_encoder_forward.1} parent=11 // pred_fallthru
          _
        // Predicated region
        $region49: #{bert_encoder_forward.1} parent=11 // pred_check
          %p500 = pneg %p264
        $region50: #{bert_encoder_forward.1} parent=11 // pred_check_branch
          %502 = sbr.rel (%p500) target = $region52
        $region51: #{bert_encoder_forward.1} parent=11 // pred_region
          _
        $region52: #{bert_encoder_forward.1} parent=11 // pred_fallthru
          _
        // Predicated region
        $region53: #{bert_encoder_forward.1} parent=11 // pred_check
          %p503 = pneg %p285
        $region54: #{bert_encoder_forward.1} parent=11 // pred_check_branch
          %505 = sbr.rel (%p503) target = $region56
        $region55: #{bert_encoder_forward.1} parent=11 // pred_region
          _
        $region56: #{bert_encoder_forward.1} parent=11 // pred_fallthru
          _
        // Predicated region
        $region57: #{bert_encoder_forward.1} parent=11 // pred_check
          %p506 = pneg %p306
        $region58: #{bert_encoder_forward.1} parent=11 // pred_check_branch
          %508 = sbr.rel (%p506) target = $region60
        $region59: #{bert_encoder_forward.1} parent=11 // pred_region
          _
        $region60: #{bert_encoder_forward.1} parent=11 // pred_fallthru
          _
        // Predicated region
        $region61: #{bert_encoder_forward.1} parent=11 // pred_check
          %p509 = pneg %p327
        $region62: #{bert_encoder_forward.1} parent=11 // pred_check_branch
          %511 = sbr.rel (%p509) target = $region64
        $region63: #{bert_encoder_forward.1} parent=11 // pred_region
          _
        $region64: #{bert_encoder_forward.1} parent=11 // pred_fallthru
          _
        // Predicated region
        $region65: #{bert_encoder_forward.1} parent=11 // pred_check
          %p512 = pneg %p348
        $region66: #{bert_encoder_forward.1} parent=11 // pred_check_branch
          %514 = sbr.rel (%p512) target = $region68
        $region67: #{bert_encoder_forward.1} parent=11 // pred_region
          _
        $region68: #{bert_encoder_forward.1} parent=11 // pred_fallthru
          _
        // Predicated region
        $region69: #{bert_encoder_forward.1} parent=11 // pred_check
          %p515 = pneg %p369
        $region70: #{bert_encoder_forward.1} parent=11 // pred_check_branch
          %517 = sbr.rel (%p515) target = $region72
        $region71: #{bert_encoder_forward.1} parent=11 // pred_region
          _
        $region72: #{bert_encoder_forward.1} parent=11 // pred_fallthru
          _
        // Predicated region
        $region73: #{bert_encoder_forward.1} parent=11 // pred_check
          %p518 = pneg %p390
        $region74: #{bert_encoder_forward.1} parent=11 // pred_check_branch
          %520 = sbr.rel (%p518) target = $region76
        $region75: #{bert_encoder_forward.1} parent=11 // pred_region
          _
        $region76: #{bert_encoder_forward.1} parent=11 // pred_fallthru
          _
        // Predicated region
        $region77: #{bert_encoder_forward.1} parent=11 // pred_check
          %p521 = pneg %p411
        $region78: #{bert_encoder_forward.1} parent=11 // pred_check_branch
          %523 = sbr.rel (%p521) target = $region80
        $region79: #{bert_encoder_forward.1} parent=11 // pred_region
          _
        $region80: #{bert_encoder_forward.1} parent=11 // pred_fallthru
          _
        // Predicated region
        $region81: #{bert_encoder_forward.1} parent=11 // pred_check
          %p524 = pneg %p432
        $region82: #{bert_encoder_forward.1} parent=11 // pred_check_branch
          %526 = sbr.rel (%p524) target = $region84
        $region83: #{bert_encoder_forward.1} parent=11 // pred_region
          _
        $region84: #{bert_encoder_forward.1} parent=11 // pred_fallthru
          _
      $region12: #{bert_encoder_forward.1} parent=5 // pred_fallthru
        _
      %p527 = scmp.lt.s32.totalorder %s28, 2
      // Predicated region
      $region85: #{bert_encoder_forward.1} parent=5 // pred_check
        %p528 = pneg %p527
      $region86: #{bert_encoder_forward.1} parent=5 // pred_check_branch
        %530 = sbr.rel (%p528) target = $region88
      $region87: #{bert_encoder_forward.1} parent=5 // pred_region
        // Predicated region
        $region89: #{bert_encoder_forward.1} parent=87 // pred_check
          %p531 = pneg %p48
        $region90: #{bert_encoder_forward.1} parent=87 // pred_check_branch
          %533 = sbr.rel (%p531) target = $region92
        $region91: #{bert_encoder_forward.1} parent=87 // pred_region
          %p534 = scmp.lt.s32.totalorder %s28, 1
          %s535 = scalar_select %p534, %s28, 1
          %s536 = smul.addr %s535, 8
          %s537 = scalar_lea.vmem %s0, %s536
        $region92: #{bert_encoder_forward.1} parent=87 // pred_fallthru
          _
      $region88: #{bert_encoder_forward.1} parent=5 // pred_fallthru
        _
      %p538 = scmp.le.s32.totalorder 1, %s28
      %p539 = scmp.lt.s32.totalorder %s28, 3
      %p540 = pnand %p538, %p539
      %p541 = pneg %p540
      // Predicated region
      $region93: #{bert_encoder_forward.1} parent=5 // pred_check
        _
      $region94: #{bert_encoder_forward.1} parent=5 // pred_check_branch
        %543 = sbr.rel (%p540) target = $region96
      $region95: #{bert_encoder_forward.1} parent=5 // pred_region
        %s544 = ssub.s32 %s28, 1
        %p545 = scmp.lt.s32.totalorder %s33, 1
        %s546 = scalar_select %p545, %s33, 1
        %s547 = smul.addr %s546, 8
        %s548 = scalar_lea.vmem %s0, %s547
        %p549 = pneg %p54
        %p550 = pneg %p51
        %p551 = pneg %p75
        %p552 = pneg %p72
        %p553 = pneg %p96
        %p554 = pneg %p93
        %p555 = pneg %p117
        %p556 = pneg %p114
        %p557 = pneg %p138
        %p558 = pneg %p135
        %p559 = pneg %p159
        %p560 = pneg %p156
        %p561 = pneg %p180
        %p562 = pneg %p177
        %p563 = pneg %p201
        %p564 = pneg %p198
        %p565 = pneg %p222
        %p566 = pneg %p219
        %p567 = pneg %p243
        %p568 = pneg %p240
        %p569 = pneg %p264
        %p570 = pneg %p261
        %p571 = pneg %p285
        %p572 = pneg %p282
        %p573 = pneg %p306
        %p574 = pneg %p303
        %p575 = pneg %p327
        %p576 = pneg %p324
        %p577 = pneg %p348
        %p578 = pneg %p345
        %p579 = pneg %p369
        %p580 = pneg %p366
        %p581 = pneg %p390
        %p582 = pneg %p387
        %p583 = pneg %p411
        %p584 = pneg %p408
        %p585 = pneg %p432
        %p586 = pneg %p429
        %p587 = pneg %p458
        %p588 = pneg %p455
        %s589 = sand.u32 %s445, 1
        %s590 = scalar_lea.sflag [#allocation3], %s589
        %s591 = sand.u32 %s445, 1
        %s592 = scalar_lea.vmem [#allocation2], %s591
        %p593 = scmp.lt.s32.totalorder %s33, 1
        %s594 = scalar_select %p593, %s33, 1
        %s595 = smul.addr %s594, 8
        %s596 = scalar_lea.vmem %s0, %s595
        %v598 = vld [vmem:[%s596] sm:$0xff]
        %v599 = vld [vmem:[%s1] sm:$0x1]
        %v600 = vld [vmem:[%s2] sm:$0x1]
        %vm601 = vcmask 261120
        %v602 = vsel %vm601, %v598, 0.0
        %603 = vadd.xlane.f32.xlu0 %v602
        %v604 = vpop.xlane.xlu0 %603
        %v605 = vrcp.pop 32.0
        %v606 = vmul.f32 %v604, %v605
        %v607 = vsub.f32 %v598, %v606
        %v608 = vmul.f32 %v607, %v607
        %v609 = vsel %vm601, %v608, 0.0
        %610 = vadd.xlane.f32.xlu0 %v609
        %v611 = vpop.xlane.xlu0 %610
        %v612 = vmul.f32 %v611, %v605
        %v613 = vadd.f32 %v612, 1e-12
        %v614 = vrsqrt.pop %v613
        %v615 = vmul.f32 %v607, %v614
        %v617 = vlaneseq
        %v618 = vshrl.u32 %v617, 7
        %v619 = vsub.s32 0, %v618
        %v620 = vrot.slane %v599, %v619
        %v622 = vmul.f32 %v615, %v620
        %v624 = vlaneseq
        %v625 = vshrl.u32 %v624, 7
        %v626 = vsub.s32 0, %v625
        %v627 = vrot.slane %v600, %v626
        %v629 = vadd.f32 %v622, %v627
        %v630 = vpack.c.bf16 %v629, %v629
        %v631 = vld [vmem:[%s3] sm:$0xf]
        %v632 = vld [vmem:[%s3 + $0x4] sm:$0xf]
        %v633 = vld [vmem:[%s3 + $0x8] sm:$0xf]
        %v634 = vld [vmem:[%s3 + $0xc] sm:$0xf]
        %v635 = vld [vmem:[%s4] sm:$0x1]
        %v637 = vlaneseq
        %v638 = vshrl.u32 %v637, 7
        %v639 = vsub.s32 0, %v638
        %v640 = vrot.slane %v635, %v639
        %v646 = vunpack.c.l.b16 %v631
        %v647 = vunpack.c.l.b16 %v632
        %v648 = vunpack.c.l.b16 %v633
        %v649 = vunpack.c.l.b16 %v634
        %v650 = vpack.c.b16 %v647, %v646
        %v651 = vpack.c.b16 %v649, %v648
        %v655 = vsel %vm601, %v630, 0
        %657 = vmatprep.subr.bf16.mxu0 0
        %658 = vmatpush1.bf16.msra.mxu0 %v650
        %659 = vmatprep.subr.bf16.mxu0 0
        %660 = vmatpush1.bf16.msra.mxu0 %v651
        %661 = vmatprep.subr.bf16.mxu0 0
        %662 = vmatpush1.bf16.msra.mxu0 0
        %663 = vmatprep.subr.bf16.mxu0 0
        %664 = vmatpush1.bf16.msra.mxu0 0
        %665 = vmatprep.subr.bf16.mxu0 0
        %666 = vmatpush1.bf16.msra.mxu0 0
        %667 = vmatprep.subr.bf16.mxu0 0
        %668 = vmatpush1.bf16.msra.mxu0 0
        %669 = vmatprep.subr.bf16.mxu0 0
        %670 = vmatpush1.bf16.msra.mxu0 0
        %671 = vmatprep.subr.bf16.mxu0 0
        %672 = vmatpush1.bf16.msra.mxu0 0
        %673 = vmatprep.subr.bf16.mxu0 0
        %674 = vmatpush1.bf16.msra.mxu0 0
        %675 = vmatprep.subr.bf16.mxu0 0
        %676 = vmatpush1.bf16.msra.mxu0 0
        %677 = vmatprep.subr.bf16.mxu0 0
        %678 = vmatpush1.bf16.msra.mxu0 0
        %679 = vmatprep.subr.bf16.mxu0 0
        %680 = vmatpush1.bf16.msra.mxu0 0
        %681 = vmatprep.subr.bf16.mxu0 0
        %682 = vmatpush1.bf16.msra.mxu0 0
        %683 = vmatprep.subr.bf16.mxu0 0
        %684 = vmatpush1.bf16.msra.mxu0 0
        %685 = vmatprep.subr.bf16.mxu0 0
        %686 = vmatpush1.bf16.msra.mxu0 0
        %687 = vmatprep.subr.bf16.mxu0 0
        %688 = vmatpush1.bf16.msra.mxu0 0
        %689 = vmatprep.mubr.bf16.mxu0 0
        %690 = vmatmul.mubr.bf16.gmra.mrb[0].mxu0 %v655
        %v691 = vpop.f32.mrb[0].mxu0
        %v692 = vadd.f32 %v640, %v691
        %v693 = vpop.f32.mrb[0].mxu0
        %v694 = vpop.f32.mrb[0].mxu0
        %v695 = vpop.f32.mrb[0].mxu0
        %696 = vdwg.mxu0
        %v697 = vpack.c.bf16 %v692, %v692
        %699 = vrot.lane.b32.xlu0 %v697, 96
        %v700 = vpop.permute.xlu0 %699
        %vm701 = vcmask 130048
        %v703 = vsel %vm701, %v697, 0
        %v706 = vsel %vm701, %v700, 0
        %708 = vmatprep.subr.bf16.mxu0 0
        %709 = vmatpush1.bf16.xpose.msra.mxu0 %v706
        %710 = vmatprep.subr.bf16.mxu0 0
        %711 = vmatpush1.bf16.xpose.msra.mxu0 0
        %712 = vmatprep.subr.bf16.mxu0 0
        %713 = vmatpush1.bf16.xpose.msra.mxu0 0
        %714 = vmatprep.subr.bf16.mxu0 0
        %715 = vmatpush1.bf16.xpose.msra.mxu0 0
        %716 = vmatprep.subr.bf16.mxu0 0
        %717 = vmatpush1.bf16.xpose.msra.mxu0 0
        %718 = vmatprep.subr.bf16.mxu0 0
        %719 = vmatpush1.bf16.xpose.msra.mxu0 0
        %720 = vmatprep.subr.bf16.mxu0 0
        %721 = vmatpush1.bf16.xpose.msra.mxu0 0
        %722 = vmatprep.subr.bf16.mxu0 0
        %723 = vmatpush1.bf16.xpose.msra.mxu0 0
        %724 = vmatprep.subr.bf16.mxu0 0
        %725 = vmatpush1.bf16.xpose.msra.mxu0 0
        %726 = vmatprep.subr.bf16.mxu0 0
        %727 = vmatpush1.bf16.xpose.msra.mxu0 0
        %728 = vmatprep.subr.bf16.mxu0 0
        %729 = vmatpush1.bf16.xpose.msra.mxu0 0
        %730 = vmatprep.subr.bf16.mxu0 0
        %731 = vmatpush1.bf16.xpose.msra.mxu0 0
        %732 = vmatprep.subr.bf16.mxu0 0
        %733 = vmatpush1.bf16.xpose.msra.mxu0 0
        %734 = vmatprep.subr.bf16.mxu0 0
        %735 = vmatpush1.bf16.xpose.msra.mxu0 0
        %736 = vmatprep.subr.bf16.mxu0 0
        %737 = vmatpush1.bf16.xpose.msra.mxu0 0
        %738 = vmatprep.subr.bf16.mxu0 0
        %739 = vmatpush1.bf16.xpose.msra.mxu0 0
        %740 = vmatprep.mubr.bf16.mxu0 0
        %741 = vmatmul.mubr.bf16.gmra.mrb[0].mxu0 %v703
        %v742 = vpop.f32.mrb[0].mxu0
        %v743 = vadd.f32 0.0, %v742
        %v744 = vpop.f32.mrb[0].mxu0
        %v745 = vpop.f32.mrb[0].mxu0
        %v746 = vpop.f32.mrb[0].mxu0
        %747 = vdwg.mxu0
        %vm748 = vcmask 64512
        %v749 = vsel %vm748, %v743, -inf
        %750 = vmax.xlane.f32.xlu0 %v749
        %v751 = vpop.xlane.xlu0 %750
        %v752 = vsub.f32 %v743, %v751
        %v753 = vmul.f32 %v752, 1.442695
        %v754 = vpow.pop %v753
        %v755 = vsel %vm748, %v754, 0.0
        %756 = vadd.xlane.f32.xlu0 %v755
        %v757 = vpop.xlane.xlu0 %756
        %v758 = vrcp.pop %v757
        %v759 = vmul.f32 %v754, %v758
        %v760 = vpack.c.bf16 %v759, %v759
        %761 = vrot.lane.b32.xlu0 %v697, 64
        %v762 = vpop.permute.xlu0 %761
        %v764 = vsel %vm748, %v760, 0
        %vm766 = vcmask 1043456
        %v768 = vsel %vm766, %v762, 0
        %770 = vmatprep.subr.bf16.mxu0 0
        %771 = vmatpush1.bf16.msra.mxu0 %v768
        %772 = vmatprep.subr.bf16.mxu0 0
        %773 = vmatpush1.bf16.msra.mxu0 0
        %774 = vmatprep.subr.bf16.mxu0 0
        %775 = vmatpush1.bf16.msra.mxu0 0
        %776 = vmatprep.subr.bf16.mxu0 0
        %777 = vmatpush1.bf16.msra.mxu0 0
        %778 = vmatprep.subr.bf16.mxu0 0
        %779 = vmatpush1.bf16.msra.mxu0 0
        %780 = vmatprep.subr.bf16.mxu0 0
        %781 = vmatpush1.bf16.msra.mxu0 0
        %782 = vmatprep.subr.bf16.mxu0 0
        %783 = vmatpush1.bf16.msra.mxu0 0
        %784 = vmatprep.subr.bf16.mxu0 0
        %785 = vmatpush1.bf16.msra.mxu0 0
        %786 = vmatprep.subr.bf16.mxu0 0
        %787 = vmatpush1.bf16.msra.mxu0 0
        %788 = vmatprep.subr.bf16.mxu0 0
        %789 = vmatpush1.bf16.msra.mxu0 0
        %790 = vmatprep.subr.bf16.mxu0 0
        %791 = vmatpush1.bf16.msra.mxu0 0
        %792 = vmatprep.subr.bf16.mxu0 0
        %793 = vmatpush1.bf16.msra.mxu0 0
        %794 = vmatprep.subr.bf16.mxu0 0
        %795 = vmatpush1.bf16.msra.mxu0 0
        %796 = vmatprep.subr.bf16.mxu0 0
        %797 = vmatpush1.bf16.msra.mxu0 0
        %798 = vmatprep.subr.bf16.mxu0 0
        %799 = vmatpush1.bf16.msra.mxu0 0
        %800 = vmatprep.subr.bf16.mxu0 0
        %801 = vmatpush1.bf16.msra.mxu0 0
        %802 = vmatprep.mubr.bf16.mxu0 0
        %803 = vmatmul.mubr.bf16.gmra.mrb[0].mxu0 %v764
        %v804 = vpop.f32.mrb[0].mxu0
        %v805 = vadd.f32 0.0, %v804
        %v806 = vpop.f32.mrb[0].mxu0
        %v807 = vpop.f32.mrb[0].mxu0
        %v808 = vpop.f32.mrb[0].mxu0
        %809 = vdwg.mxu0
        %810 = vrot.lane.b32.xlu0 %v697, 112
        %v811 = vpop.permute.xlu0 %810
        %812 = vrot.lane.b32.xlu0 %v697, 80
        %v813 = vpop.permute.xlu0 %812
        %v815 = vsel %vm701, %v811, 0
        %v818 = vsel %vm701, %v813, 0
        %820 = vmatprep.subr.bf16.mxu0 0
        %821 = vmatpush1.bf16.xpose.msra.mxu0 %v818
        %822 = vmatprep.subr.bf16.mxu0 0
        %823 = vmatpush1.bf16.xpose.msra.mxu0 0
        %824 = vmatprep.subr.bf16.mxu0 0
        %825 = vmatpush1.bf16.xpose.msra.mxu0 0
        %826 = vmatprep.subr.bf16.mxu0 0
        %827 = vmatpush1.bf16.xpose.msra.mxu0 0
        %828 = vmatprep.subr.bf16.mxu0 0
        %829 = vmatpush1.bf16.xpose.msra.mxu0 0
        %830 = vmatprep.subr.bf16.mxu0 0
        %831 = vmatpush1.bf16.xpose.msra.mxu0 0
        %832 = vmatprep.subr.bf16.mxu0 0
        %833 = vmatpush1.bf16.xpose.msra.mxu0 0
        %834 = vmatprep.subr.bf16.mxu0 0
        %835 = vmatpush1.bf16.xpose.msra.mxu0 0
        %836 = vmatprep.subr.bf16.mxu0 0
        %837 = vmatpush1.bf16.xpose.msra.mxu0 0
        %838 = vmatprep.subr.bf16.mxu0 0
        %839 = vmatpush1.bf16.xpose.msra.mxu0 0
        %840 = vmatprep.subr.bf16.mxu0 0
        %841 = vmatpush1.bf16.xpose.msra.mxu0 0
        %842 = vmatprep.subr.bf16.mxu0 0
        %843 = vmatpush1.bf16.xpose.msra.mxu0 0
        %844 = vmatprep.subr.bf16.mxu0 0
        %845 = vmatpush1.bf16.xpose.msra.mxu0 0
        %846 = vmatprep.subr.bf16.mxu0 0
        %847 = vmatpush1.bf16.xpose.msra.mxu0 0
        %848 = vmatprep.subr.bf16.mxu0 0
        %849 = vmatpush1.bf16.xpose.msra.mxu0 0
        %850 = vmatprep.subr.bf16.mxu0 0
        %851 = vmatpush1.bf16.xpose.msra.mxu0 0
        %852 = vmatprep.mubr.bf16.mxu0 0
        %853 = vmatmul.mubr.bf16.gmra.mrb[0].mxu0 %v815
        %v854 = vpop.f32.mrb[0].mxu0
        %v855 = vadd.f32 0.0, %v854
        %v856 = vpop.f32.mrb[0].mxu0
        %v857 = vpop.f32.mrb[0].mxu0
        %v858 = vpop.f32.mrb[0].mxu0
        %859 = vdwg.mxu0
        %v860 = vsel %vm748, %v855, -inf
        %861 = vmax.xlane.f32.xlu0 %v860
        %v862 = vpop.xlane.xlu0 %861
        %v863 = vsub.f32 %v855, %v862
        %v864 = vmul.f32 %v863, 1.442695
        %v865 = vpow.pop %v864
        %v866 = vsel %vm748, %v865, 0.0
        %867 = vadd.xlane.f32.xlu0 %v866
        %v868 = vpop.xlane.xlu0 %867
        %v869 = vrcp.pop %v868
        %v870 = vmul.f32 %v865, %v869
        %v871 = vpack.c.bf16 %v870, %v870
        %872 = vrot.lane.b32.xlu0 %v697, 48
        %v873 = vpop.permute.xlu0 %872
        %v875 = vsel %vm748, %v871, 0
        %v878 = vsel %vm766, %v873, 0
        %880 = vmatprep.subr.bf16.mxu0 0
        %881 = vmatpush1.bf16.msra.mxu0 %v878
        %882 = vmatprep.subr.bf16.mxu0 0
        %883 = vmatpush1.bf16.msra.mxu0 0
        %884 = vmatprep.subr.bf16.mxu0 0
        %885 = vmatpush1.bf16.msra.mxu0 0
        %886 = vmatprep.subr.bf16.mxu0 0
        %887 = vmatpush1.bf16.msra.mxu0 0
        %888 = vmatprep.subr.bf16.mxu0 0
        %889 = vmatpush1.bf16.msra.mxu0 0
        %890 = vmatprep.subr.bf16.mxu0 0
        %891 = vmatpush1.bf16.msra.mxu0 0
        %892 = vmatprep.subr.bf16.mxu0 0
        %893 = vmatpush1.bf16.msra.mxu0 0
        %894 = vmatprep.subr.bf16.mxu0 0
        %895 = vmatpush1.bf16.msra.mxu0 0
        %896 = vmatprep.subr.bf16.mxu0 0
        %897 = vmatpush1.bf16.msra.mxu0 0
        %898 = vmatprep.subr.bf16.mxu0 0
        %899 = vmatpush1.bf16.msra.mxu0 0
        %900 = vmatprep.subr.bf16.mxu0 0
        %901 = vmatpush1.bf16.msra.mxu0 0
        %902 = vmatprep.subr.bf16.mxu0 0
        %903 = vmatpush1.bf16.msra.mxu0 0
        %904 = vmatprep.subr.bf16.mxu0 0
        %905 = vmatpush1.bf16.msra.mxu0 0
        %906 = vmatprep.subr.bf16.mxu0 0
        %907 = vmatpush1.bf16.msra.mxu0 0
        %908 = vmatprep.subr.bf16.mxu0 0
        %909 = vmatpush1.bf16.msra.mxu0 0
        %910 = vmatprep.subr.bf16.mxu0 0
        %911 = vmatpush1.bf16.msra.mxu0 0
        %912 = vmatprep.mubr.bf16.mxu0 0
        %913 = vmatmul.mubr.bf16.gmra.mrb[0].mxu0 %v875
        %v914 = vpop.f32.mrb[0].mxu0
        %v915 = vadd.f32 0.0, %v914
        %v916 = vpop.f32.mrb[0].mxu0
        %v917 = vpop.f32.mrb[0].mxu0
        %v918 = vpop.f32.mrb[0].mxu0
        %919 = vdwg.mxu0
        %921 = vrot.lane.b32.xlu0 %v915, 16
        %v922 = vpop.permute.xlu0 %921
        %v924 = vsel %vm701, %v805, %v922
        %v925 = vpack.c.bf16 %v924, %v924
        %v926 = vld [vmem:[%s5] sm:$0xf]
        %v927 = vld [vmem:[%s5 + $0x4] sm:$0xf]
        %v928 = vld [vmem:[%s5 + $0x8] sm:$0xf]
        %v929 = vld [vmem:[%s5 + $0xc] sm:$0xf]
        %v930 = vld [vmem:[%s6] sm:$0x1]
        %v932 = vlaneseq
        %v933 = vshrl.u32 %v932, 7
        %v934 = vsub.s32 0, %v933
        %v935 = vrot.slane %v930, %v934
        %v941 = vunpack.c.l.b16 %v926
        %v942 = vunpack.c.l.b16 %v927
        %v943 = vunpack.c.l.b16 %v928
        %v944 = vunpack.c.l.b16 %v929
        %v945 = vpack.c.b16 %v942, %v941
        %v946 = vpack.c.b16 %v944, %v943
        %v950 = vsel %vm601, %v925, 0
        %952 = vmatprep.subr.bf16.mxu0 0
        %953 = vmatpush1.bf16.msra.mxu0 %v945
        %954 = vmatprep.subr.bf16.mxu0 0
        %955 = vmatpush1.bf16.msra.mxu0 %v946
        %956 = vmatprep.subr.bf16.mxu0 0
        %957 = vmatpush1.bf16.msra.mxu0 0
        %958 = vmatprep.subr.bf16.mxu0 0
        %959 = vmatpush1.bf16.msra.mxu0 0
        %960 = vmatprep.subr.bf16.mxu0 0
        %961 = vmatpush1.bf16.msra.mxu0 0
        %962 = vmatprep.subr.bf16.mxu0 0
        %963 = vmatpush1.bf16.msra.mxu0 0
        %964 = vmatprep.subr.bf16.mxu0 0
        %965 = vmatpush1.bf16.msra.mxu0 0
        %966 = vmatprep.subr.bf16.mxu0 0
        %967 = vmatpush1.bf16.msra.mxu0 0
        %968 = vmatprep.subr.bf16.mxu0 0
        %969 = vmatpush1.bf16.msra.mxu0 0
        %970 = vmatprep.subr.bf16.mxu0 0
        %971 = vmatpush1.bf16.msra.mxu0 0
        %972 = vmatprep.subr.bf16.mxu0 0
        %973 = vmatpush1.bf16.msra.mxu0 0
        %974 = vmatprep.subr.bf16.mxu0 0
        %975 = vmatpush1.bf16.msra.mxu0 0
        %976 = vmatprep.subr.bf16.mxu0 0
        %977 = vmatpush1.bf16.msra.mxu0 0
        %978 = vmatprep.subr.bf16.mxu0 0
        %979 = vmatpush1.bf16.msra.mxu0 0
        %980 = vmatprep.subr.bf16.mxu0 0
        %981 = vmatpush1.bf16.msra.mxu0 0
        %982 = vmatprep.subr.bf16.mxu0 0
        %983 = vmatpush1.bf16.msra.mxu0 0
        %984 = vmatprep.mubr.bf16.mxu0 0
        %985 = vmatmul.mubr.bf16.gmra.mrb[0].mxu0 %v950
        %v986 = vpop.f32.mrb[0].mxu0
        %v987 = vadd.f32 %v935, %v986
        %v988 = vpop.f32.mrb[0].mxu0
        %v989 = vpop.f32.mrb[0].mxu0
        %v990 = vpop.f32.mrb[0].mxu0
        %991 = vdwg.mxu0
        %v992 = vadd.f32 %v987, %v629
        %v993 = vld [vmem:[%s7] sm:$0x1]
        %v994 = vld [vmem:[%s8] sm:$0x1]
        %v995 = vsel %vm601, %v992, 0.0
        %996 = vadd.xlane.f32.xlu0 %v995
        %v997 = vpop.xlane.xlu0 %996
        %v998 = vmul.f32 %v997, %v605
        %v999 = vsub.f32 %v992, %v998
        %v1000 = vmul.f32 %v999, %v999
        %v1001 = vsel %vm601, %v1000, 0.0
        %1002 = vadd.xlane.f32.xlu0 %v1001
        %v1003 = vpop.xlane.xlu0 %1002
        %v1004 = vmul.f32 %v1003, %v605
        %v1005 = vadd.f32 %v1004, 1e-12
        %v1006 = vrsqrt.pop %v1005
        %v1007 = vmul.f32 %v999, %v1006
        %v1009 = vlaneseq
        %v1010 = vshrl.u32 %v1009, 7
        %v1011 = vsub.s32 0, %v1010
        %v1012 = vrot.slane %v993, %v1011
        %v1014 = vmul.f32 %v1007, %v1012
        %v1016 = vlaneseq
        %v1017 = vshrl.u32 %v1016, 7
        %v1018 = vsub.s32 0, %v1017
        %v1019 = vrot.slane %v994, %v1018
        %v1021 = vadd.f32 %v1014, %v1019
        %v1022 = vpack.c.bf16 %v1021, %v1021
        %v1023 = vld [vmem:[%s9] sm:$0xf]
        %v1024 = vld [vmem:[%s9 + $0x4] sm:$0xf]
        %v1025 = vld [vmem:[%s9 + $0x8] sm:$0xf]
        %v1026 = vld [vmem:[%s9 + $0xc] sm:$0xf]
        %v1027 = vld [vmem:[%s10] sm:$0x1]
        %v1029 = vlaneseq
        %v1030 = vshrl.u32 %v1029, 7
        %v1031 = vsub.s32 0, %v1030
        %v1032 = vrot.slane %v1027, %v1031
        %v1038 = vunpack.c.l.b16 %v1023
        %v1039 = vunpack.c.l.b16 %v1024
        %v1040 = vunpack.c.l.b16 %v1025
        %v1041 = vunpack.c.l.b16 %v1026
        %v1042 = vpack.c.b16 %v1039, %v1038
        %v1043 = vpack.c.b16 %v1041, %v1040
        %v1047 = vsel %vm601, %v1022, 0
        %1049 = vmatprep.subr.bf16.mxu0 0
        %1050 = vmatpush1.bf16.msra.mxu0 %v1042
        %1051 = vmatprep.subr.bf16.mxu0 0
        %1052 = vmatpush1.bf16.msra.mxu0 %v1043
        %1053 = vmatprep.subr.bf16.mxu0 0
        %1054 = vmatpush1.bf16.msra.mxu0 0
        %1055 = vmatprep.subr.bf16.mxu0 0
        %1056 = vmatpush1.bf16.msra.mxu0 0
        %1057 = vmatprep.subr.bf16.mxu0 0
        %1058 = vmatpush1.bf16.msra.mxu0 0
        %1059 = vmatprep.subr.bf16.mxu0 0
        %1060 = vmatpush1.bf16.msra.mxu0 0
        %1061 = vmatprep.subr.bf16.mxu0 0
        %1062 = vmatpush1.bf16.msra.mxu0 0
        %1063 = vmatprep.subr.bf16.mxu0 0
        %1064 = vmatpush1.bf16.msra.mxu0 0
        %1065 = vmatprep.subr.bf16.mxu0 0
        %1066 = vmatpush1.bf16.msra.mxu0 0
        %1067 = vmatprep.subr.bf16.mxu0 0
        %1068 = vmatpush1.bf16.msra.mxu0 0
        %1069 = vmatprep.subr.bf16.mxu0 0
        %1070 = vmatpush1.bf16.msra.mxu0 0
        %1071 = vmatprep.subr.bf16.mxu0 0
        %1072 = vmatpush1.bf16.msra.mxu0 0
        %1073 = vmatprep.subr.bf16.mxu0 0
        %1074 = vmatpush1.bf16.msra.mxu0 0
        %1075 = vmatprep.subr.bf16.mxu0 0
        %1076 = vmatpush1.bf16.msra.mxu0 0
        %1077 = vmatprep.subr.bf16.mxu0 0
        %1078 = vmatpush1.bf16.msra.mxu0 0
        %1079 = vmatprep.subr.bf16.mxu0 0
        %1080 = vmatpush1.bf16.msra.mxu0 0
        %1081 = vmatprep.mubr.bf16.mxu0 0
        %1082 = vmatmul.mubr.bf16.gmra.mrb[0].mxu0 %v1047
        %v1083 = vpop.f32.mrb[0].mxu0
        %v1084 = vadd.f32 %v1032, %v1083
        %v1085 = vpop.f32.mrb[0].mxu0
        %v1086 = vpop.f32.mrb[0].mxu0
        %v1087 = vpop.f32.mrb[0].mxu0
        %1088 = vdwg.mxu0
        %v1089 = vmul.f32 %v1084, 0.5
        %v1090 = vmul.f32 %v1084, 0.044715
        %v1091 = vmul.f32 %v1090, %v1084
        %v1092 = vmul.f32 %v1091, %v1084
        %v1093 = vadd.f32 %v1084, %v1092
        %v1094 = vmul.f32 %v1093, 0.7978846
        %v1095 = vtanh.pop %v1094
        %v1096 = vadd.f32 %v1095, 1.0
        %v1097 = vmul.f32 %v1089, %v1096
        %v1098 = vpack.c.bf16 %v1097, %v1097
        %v1099 = vld [vmem:[%s11] sm:$0xf]
        %v1100 = vld [vmem:[%s11 + $0x4] sm:$0xf]
        %v1101 = vld [vmem:[%s11 + $0x8] sm:$0xf]
        %v1102 = vld [vmem:[%s11 + $0xc] sm:$0xf]
        %v1103 = vld [vmem:[%s11 + $0x10] sm:$0xf]
        %v1104 = vld [vmem:[%s11 + $0x14] sm:$0xf]
        %v1105 = vld [vmem:[%s11 + $0x18] sm:$0xf]
        %v1106 = vld [vmem:[%s11 + $0x1c] sm:$0xf]
        %v1107 = vld [vmem:[%s12] sm:$0x1]
        %v1109 = vlaneseq
        %v1110 = vshrl.u32 %v1109, 7
        %v1111 = vsub.s32 0, %v1110
        %v1112 = vrot.slane %v1107, %v1111
        %v1122 = vunpack.c.l.b16 %v1099
        %v1123 = vunpack.c.l.b16 %v1100
        %v1124 = vunpack.c.l.b16 %v1101
        %v1125 = vunpack.c.l.b16 %v1102
        %v1126 = vunpack.c.l.b16 %v1103
        %v1127 = vunpack.c.l.b16 %v1104
        %v1128 = vunpack.c.l.b16 %v1105
        %v1129 = vunpack.c.l.b16 %v1106
        %v1130 = vpack.c.b16 %v1123, %v1122
        %v1131 = vpack.c.b16 %v1125, %v1124
        %v1132 = vpack.c.b16 %v1127, %v1126
        %v1133 = vpack.c.b16 %v1129, %v1128
        %vm1138 = vcmask 523264
        %v1140 = vsel %vm1138, %v1098, 0
        %1142 = vmatprep.subr.bf16.mxu0 0
        %1143 = vmatpush1.bf16.msra.mxu0 %v1130
        %1144 = vmatprep.subr.bf16.mxu0 0
        %1145 = vmatpush1.bf16.msra.mxu0 %v1131
        %1146 = vmatprep.subr.bf16.mxu0 0
        %1147 = vmatpush1.bf16.msra.mxu0 %v1132
        %1148 = vmatprep.subr.bf16.mxu0 0
        %1149 = vmatpush1.bf16.msra.mxu0 %v1133
        %1150 = vmatprep.subr.bf16.mxu0 0
        %1151 = vmatpush1.bf16.msra.mxu0 0
        %1152 = vmatprep.subr.bf16.mxu0 0
        %1153 = vmatpush1.bf16.msra.mxu0 0
        %1154 = vmatprep.subr.bf16.mxu0 0
        %1155 = vmatpush1.bf16.msra.mxu0 0
        %1156 = vmatprep.subr.bf16.mxu0 0
        %1157 = vmatpush1.bf16.msra.mxu0 0
        %1158 = vmatprep.subr.bf16.mxu0 0
        %1159 = vmatpush1.bf16.msra.mxu0 0
        %1160 = vmatprep.subr.bf16.mxu0 0
        %1161 = vmatpush1.bf16.msra.mxu0 0
        %1162 = vmatprep.subr.bf16.mxu0 0
        %1163 = vmatpush1.bf16.msra.mxu0 0
        %1164 = vmatprep.subr.bf16.mxu0 0
        %1165 = vmatpush1.bf16.msra.mxu0 0
        %1166 = vmatprep.subr.bf16.mxu0 0
        %1167 = vmatpush1.bf16.msra.mxu0 0
        %1168 = vmatprep.subr.bf16.mxu0 0
        %1169 = vmatpush1.bf16.msra.mxu0 0
        %1170 = vmatprep.subr.bf16.mxu0 0
        %1171 = vmatpush1.bf16.msra.mxu0 0
        %1172 = vmatprep.subr.bf16.mxu0 0
        %1173 = vmatpush1.bf16.msra.mxu0 0
        %1174 = vmatprep.mubr.bf16.mxu0 0
        %1175 = vmatmul.mubr.bf16.gmra.mrb[0].mxu0 %v1140
        %v1176 = vpop.f32.mrb[0].mxu0
        %v1177 = vadd.f32 %v1112, %v1176
        %v1178 = vpop.f32.mrb[0].mxu0
        %v1179 = vpop.f32.mrb[0].mxu0
        %v1180 = vpop.f32.mrb[0].mxu0
        %1181 = vdwg.mxu0
        %v1182 = vadd.f32 %v1177, %v1021
        %v1183 = vld [vmem:[%s13] sm:$0x1]
        %v1184 = vld [vmem:[%s14] sm:$0x1]
        %v1185 = vsel %vm601, %v1182, 0.0
        %1186 = vadd.xlane.f32.xlu0 %v1185
        %v1187 = vpop.xlane.xlu0 %1186
        %v1188 = vmul.f32 %v1187, %v605
        %v1189 = vsub.f32 %v1182, %v1188
        %v1190 = vmul.f32 %v1189, %v1189
        %v1191 = vsel %vm601, %v1190, 0.0
        %1192 = vadd.xlane.f32.xlu0 %v1191
        %v1193 = vpop.xlane.xlu0 %1192
        %v1194 = vmul.f32 %v1193, %v605
        %v1195 = vadd.f32 %v1194, 1e-12
        %v1196 = vrsqrt.pop %v1195
        %v1197 = vmul.f32 %v1189, %v1196
        %v1199 = vlaneseq
        %v1200 = vshrl.u32 %v1199, 7
        %v1201 = vsub.s32 0, %v1200
        %v1202 = vrot.slane %v1183, %v1201
        %v1204 = vmul.f32 %v1197, %v1202
        %v1206 = vlaneseq
        %v1207 = vshrl.u32 %v1206, 7
        %v1208 = vsub.s32 0, %v1207
        %v1209 = vrot.slane %v1184, %v1208
        %v1211 = vadd.f32 %v1204, %v1209
        %v1212 = vpack.c.bf16 %v1211, %v1211
        %s1213 = scalar_lea.vmem %s3, 16
        %v1214 = vld [vmem:[%s1213] sm:$0xf]
        %v1215 = vld [vmem:[%s1213 + $0x4] sm:$0xf]
        %v1216 = vld [vmem:[%s1213 + $0x8] sm:$0xf]
        %v1217 = vld [vmem:[%s1213 + $0xc] sm:$0xf]
        %s1218 = scalar_lea.vmem %s4, 1
        %v1219 = vld [vmem:[%s1218] sm:$0x1]
        %v1221 = vlaneseq
        %v1222 = vshrl.u32 %v1221, 7
        %v1223 = vsub.s32 0, %v1222
        %v1224 = vrot.slane %v1219, %v1223
        %v1230 = vunpack.c.l.b16 %v1214
        %v1231 = vunpack.c.l.b16 %v1215
        %v1232 = vunpack.c.l.b16 %v1216
        %v1233 = vunpack.c.l.b16 %v1217
        %v1234 = vpack.c.b16 %v1231, %v1230
        %v1235 = vpack.c.b16 %v1233, %v1232
        %v1239 = vsel %vm601, %v1212, 0
        %1241 = vmatprep.subr.bf16.mxu0 0
        %1242 = vmatpush1.bf16.msra.mxu0 %v1234
        %1243 = vmatprep.subr.bf16.mxu0 0
        %1244 = vmatpush1.bf16.msra.mxu0 %v1235
        %1245 = vmatprep.subr.bf16.mxu0 0
        %1246 = vmatpush1.bf16.msra.mxu0 0
        %1247 = vmatprep.subr.bf16.mxu0 0
        %1248 = vmatpush1.bf16.msra.mxu0 0
        %1249 = vmatprep.subr.bf16.mxu0 0
        %1250 = vmatpush1.bf16.msra.mxu0 0
        %1251 = vmatprep.subr.bf16.mxu0 0
        %1252 = vmatpush1.bf16.msra.mxu0 0
        %1253 = vmatprep.subr.bf16.mxu0 0
        %1254 = vmatpush1.bf16.msra.mxu0 0
        %1255 = vmatprep.subr.bf16.mxu0 0
        %1256 = vmatpush1.bf16.msra.mxu0 0
        %1257 = vmatprep.subr.bf16.mxu0 0
        %1258 = vmatpush1.bf16.msra.mxu0 0
        %1259 = vmatprep.subr.bf16.mxu0 0
        %1260 = vmatpush1.bf16.msra.mxu0 0
        %1261 = vmatprep.subr.bf16.mxu0 0
        %1262 = vmatpush1.bf16.msra.mxu0 0
        %1263 = vmatprep.subr.bf16.mxu0 0
        %1264 = vmatpush1.bf16.msra.mxu0 0
        %1265 = vmatprep.subr.bf16.mxu0 0
        %1266 = vmatpush1.bf16.msra.mxu0 0
        %1267 = vmatprep.subr.bf16.mxu0 0
        %1268 = vmatpush1.bf16.msra.mxu0 0
        %1269 = vmatprep.subr.bf16.mxu0 0
        %1270 = vmatpush1.bf16.msra.mxu0 0
        %1271 = vmatprep.subr.bf16.mxu0 0
        %1272 = vmatpush1.bf16.msra.mxu0 0
        %1273 = vmatprep.mubr.bf16.mxu0 0
        %1274 = vmatmul.mubr.bf16.gmra.mrb[0].mxu0 %v1239
        %v1275 = vpop.f32.mrb[0].mxu0
        %v1276 = vadd.f32 %v1224, %v1275
        %v1277 = vpop.f32.mrb[0].mxu0
        %v1278 = vpop.f32.mrb[0].mxu0
        %v1279 = vpop.f32.mrb[0].mxu0
        %1280 = vdwg.mxu0
        %v1281 = vpack.c.bf16 %v1276, %v1276
        %1283 = vrot.lane.b32.xlu0 %v1281, 96
        %v1284 = vpop.permute.xlu0 %1283
        %v1286 = vsel %vm701, %v1281, 0
        %v1289 = vsel %vm701, %v1284, 0
        %1291 = vmatprep.subr.bf16.mxu0 0
        %1292 = vmatpush1.bf16.xpose.msra.mxu0 %v1289
        %1293 = vmatprep.subr.bf16.mxu0 0
        %1294 = vmatpush1.bf16.xpose.msra.mxu0 0
        %1295 = vmatprep.subr.bf16.mxu0 0
        %1296 = vmatpush1.bf16.xpose.msra.mxu0 0
        %1297 = vmatprep.subr.bf16.mxu0 0
        %1298 = vmatpush1.bf16.xpose.msra.mxu0 0
        %1299 = vmatprep.subr.bf16.mxu0 0
        %1300 = vmatpush1.bf16.xpose.msra.mxu0 0
        %1301 = vmatprep.subr.bf16.mxu0 0
        %1302 = vmatpush1.bf16.xpose.msra.mxu0 0
        %1303 = vmatprep.subr.bf16.mxu0 0
        %1304 = vmatpush1.bf16.xpose.msra.mxu0 0
        %1305 = vmatprep.subr.bf16.mxu0 0
        %1306 = vmatpush1.bf16.xpose.msra.mxu0 0
        %1307 = vmatprep.subr.bf16.mxu0 0
        %1308 = vmatpush1.bf16.xpose.msra.mxu0 0
        %1309 = vmatprep.subr.bf16.mxu0 0
        %1310 = vmatpush1.bf16.xpose.msra.mxu0 0
        %1311 = vmatprep.subr.bf16.mxu0 0
        %1312 = vmatpush1.bf16.xpose.msra.mxu0 0
        %1313 = vmatprep.subr.bf16.mxu0 0
        %1314 = vmatpush1.bf16.xpose.msra.mxu0 0
        %1315 = vmatprep.subr.bf16.mxu0 0
        %1316 = vmatpush1.bf16.xpose.msra.mxu0 0
        %1317 = vmatprep.subr.bf16.mxu0 0
        %1318 = vmatpush1.bf16.xpose.msra.mxu0 0
        %1319 = vmatprep.subr.bf16.mxu0 0
        %1320 = vmatpush1.bf16.xpose.msra.mxu0 0
        %1321 = vmatprep.subr.bf16.mxu0 0
        %1322 = vmatpush1.bf16.xpose.msra.mxu0 0
        %1323 = vmatprep.mubr.bf16.mxu0 0
        %1324 = vmatmul.mubr.bf16.gmra.mrb[0].mxu0 %v1286
        %v1325 = vpop.f32.mrb[0].mxu0
        %v1326 = vadd.f32 0.0, %v1325
        %v1327 = vpop.f32.mrb[0].mxu0
        %v1328 = vpop.f32.mrb[0].mxu0
        %v1329 = vpop.f32.mrb[0].mxu0
        %1330 = vdwg.mxu0
        %v1331 = vsel %vm748, %v1326, -inf
        %1332 = vmax.xlane.f32.xlu0 %v1331
        %v1333 = vpop.xlane.xlu0 %1332
        %v1334 = vsub.f32 %v1326, %v1333
        %v1335 = vmul.f32 %v1334, 1.442695
        %v1336 = vpow.pop %v1335
        %v1337 = vsel %vm748, %v1336, 0.0
        %1338 = vadd.xlane.f32.xlu0 %v1337
        %v1339 = vpop.xlane.xlu0 %1338
        %v1340 = vrcp.pop %v1339
        %v1341 = vmul.f32 %v1336, %v1340
        %v1342 = vpack.c.bf16 %v1341, %v1341
        %1343 = vrot.lane.b32.xlu0 %v1281, 64
        %v1344 = vpop.permute.xlu0 %1343
        %v1346 = vsel %vm748, %v1342, 0
        %v1349 = vsel %vm766, %v1344, 0
        %1351 = vmatprep.subr.bf16.mxu0 0
        %1352 = vmatpush1.bf16.msra.mxu0 %v1349
        %1353 = vmatprep.subr.bf16.mxu0 0
        %1354 = vmatpush1.bf16.msra.mxu0 0
        %1355 = vmatprep.subr.bf16.mxu0 0
        %1356 = vmatpush1.bf16.msra.mxu0 0
        %1357 = vmatprep.subr.bf16.mxu0 0
        %1358 = vmatpush1.bf16.msra.mxu0 0
        %1359 = vmatprep.subr.bf16.mxu0 0
        %1360 = vmatpush1.bf16.msra.mxu0 0
        %1361 = vmatprep.subr.bf16.mxu0 0
        %1362 = vmatpush1.bf16.msra.mxu0 0
        %1363 = vmatprep.subr.bf16.mxu0 0
        %1364 = vmatpush1.bf16.msra.mxu0 0
        %1365 = vmatprep.subr.bf16.mxu0 0
        %1366 = vmatpush1.bf16.msra.mxu0 0
        %1367 = vmatprep.subr.bf16.mxu0 0
        %1368 = vmatpush1.bf16.msra.mxu0 0
        %1369 = vmatprep.subr.bf16.mxu0 0
        %1370 = vmatpush1.bf16.msra.mxu0 0
        %1371 = vmatprep.subr.bf16.mxu0 0
        %1372 = vmatpush1.bf16.msra.mxu0 0
        %1373 = vmatprep.subr.bf16.mxu0 0
        %1374 = vmatpush1.bf16.msra.mxu0 0
        %1375 = vmatprep.subr.bf16.mxu0 0
        %1376 = vmatpush1.bf16.msra.mxu0 0
        %1377 = vmatprep.subr.bf16.mxu0 0
        %1378 = vmatpush1.bf16.msra.mxu0 0
        %1379 = vmatprep.subr.bf16.mxu0 0
        %1380 = vmatpush1.bf16.msra.mxu0 0
        %1381 = vmatprep.subr.bf16.mxu0 0
        %1382 = vmatpush1.bf16.msra.mxu0 0
        %1383 = vmatprep.mubr.bf16.mxu0 0
        %1384 = vmatmul.mubr.bf16.gmra.mrb[0].mxu0 %v1346
        %v1385 = vpop.f32.mrb[0].mxu0
        %v1386 = vadd.f32 0.0, %v1385
        %v1387 = vpop.f32.mrb[0].mxu0
        %v1388 = vpop.f32.mrb[0].mxu0
        %v1389 = vpop.f32.mrb[0].mxu0
        %1390 = vdwg.mxu0
        %1391 = vrot.lane.b32.xlu0 %v1281, 112
        %v1392 = vpop.permute.xlu0 %1391
        %1393 = vrot.lane.b32.xlu0 %v1281, 80
        %v1394 = vpop.permute.xlu0 %1393
        %v1396 = vsel %vm701, %v1392, 0
        %v1399 = vsel %vm701, %v1394, 0
        %1401 = vmatprep.subr.bf16.mxu0 0
        %1402 = vmatpush1.bf16.xpose.msra.mxu0 %v1399
        %1403 = vmatprep.subr.bf16.mxu0 0
        %1404 = vmatpush1.bf16.xpose.msra.mxu0 0
        %1405 = vmatprep.subr.bf16.mxu0 0
        %1406 = vmatpush1.bf16.xpose.msra.mxu0 0
        %1407 = vmatprep.subr.bf16.mxu0 0
        %1408 = vmatpush1.bf16.xpose.msra.mxu0 0
        %1409 = vmatprep.subr.bf16.mxu0 0
        %1410 = vmatpush1.bf16.xpose.msra.mxu0 0
        %1411 = vmatprep.subr.bf16.mxu0 0
        %1412 = vmatpush1.bf16.xpose.msra.mxu0 0
        %1413 = vmatprep.subr.bf16.mxu0 0
        %1414 = vmatpush1.bf16.xpose.msra.mxu0 0
        %1415 = vmatprep.subr.bf16.mxu0 0
        %1416 = vmatpush1.bf16.xpose.msra.mxu0 0
        %1417 = vmatprep.subr.bf16.mxu0 0
        %1418 = vmatpush1.bf16.xpose.msra.mxu0 0
        %1419 = vmatprep.subr.bf16.mxu0 0
        %1420 = vmatpush1.bf16.xpose.msra.mxu0 0
        %1421 = vmatprep.subr.bf16.mxu0 0
        %1422 = vmatpush1.bf16.xpose.msra.mxu0 0
        %1423 = vmatprep.subr.bf16.mxu0 0
        %1424 = vmatpush1.bf16.xpose.msra.mxu0 0
        %1425 = vmatprep.subr.bf16.mxu0 0
        %1426 = vmatpush1.bf16.xpose.msra.mxu0 0
        %1427 = vmatprep.subr.bf16.mxu0 0
        %1428 = vmatpush1.bf16.xpose.msra.mxu0 0
        %1429 = vmatprep.subr.bf16.mxu0 0
        %1430 = vmatpush1.bf16.xpose.msra.mxu0 0
        %1431 = vmatprep.subr.bf16.mxu0 0
        %1432 = vmatpush1.bf16.xpose.msra.mxu0 0
        %1433 = vmatprep.mubr.bf16.mxu0 0
        %1434 = vmatmul.mubr.bf16.gmra.mrb[0].mxu0 %v1396
        %v1435 = vpop.f32.mrb[0].mxu0
        %v1436 = vadd.f32 0.0, %v1435
        %v1437 = vpop.f32.mrb[0].mxu0
        %v1438 = vpop.f32.mrb[0].mxu0
        %v1439 = vpop.f32.mrb[0].mxu0
        %1440 = vdwg.mxu0
        %v1441 = vsel %vm748, %v1436, -inf
        %1442 = vmax.xlane.f32.xlu0 %v1441
        %v1443 = vpop.xlane.xlu0 %1442
        %v1444 = vsub.f32 %v1436, %v1443
        %v1445 = vmul.f32 %v1444, 1.442695
        %v1446 = vpow.pop %v1445
        %v1447 = vsel %vm748, %v1446, 0.0
        %1448 = vadd.xlane.f32.xlu0 %v1447
        %v1449 = vpop.xlane.xlu0 %1448
        %v1450 = vrcp.pop %v1449
        %v1451 = vmul.f32 %v1446, %v1450
        %v1452 = vpack.c.bf16 %v1451, %v1451
        %1453 = vrot.lane.b32.xlu0 %v1281, 48
        %v1454 = vpop.permute.xlu0 %1453
        %v1456 = vsel %vm748, %v1452, 0
        %v1459 = vsel %vm766, %v1454, 0
        %1461 = vmatprep.subr.bf16.mxu0 0
        %1462 = vmatpush1.bf16.msra.mxu0 %v1459
        %1463 = vmatprep.subr.bf16.mxu0 0
        %1464 = vmatpush1.bf16.msra.mxu0 0
        %1465 = vmatprep.subr.bf16.mxu0 0
        %1466 = vmatpush1.bf16.msra.mxu0 0
        %1467 = vmatprep.subr.bf16.mxu0 0
        %1468 = vmatpush1.bf16.msra.mxu0 0
        %1469 = vmatprep.subr.bf16.mxu0 0
        %1470 = vmatpush1.bf16.msra.mxu0 0
        %1471 = vmatprep.subr.bf16.mxu0 0
        %1472 = vmatpush1.bf16.msra.mxu0 0
        %1473 = vmatprep.subr.bf16.mxu0 0
        %1474 = vmatpush1.bf16.msra.mxu0 0
        %1475 = vmatprep.subr.bf16.mxu0 0
        %1476 = vmatpush1.bf16.msra.mxu0 0
        %1477 = vmatprep.subr.bf16.mxu0 0
        %1478 = vmatpush1.bf16.msra.mxu0 0
        %1479 = vmatprep.subr.bf16.mxu0 0
        %1480 = vmatpush1.bf16.msra.mxu0 0
        %1481 = vmatprep.subr.bf16.mxu0 0
        %1482 = vmatpush1.bf16.msra.mxu0 0
        %1483 = vmatprep.subr.bf16.mxu0 0
        %1484 = vmatpush1.bf16.msra.mxu0 0
        %1485 = vmatprep.subr.bf16.mxu0 0
        %1486 = vmatpush1.bf16.msra.mxu0 0
        %1487 = vmatprep.subr.bf16.mxu0 0
        %1488 = vmatpush1.bf16.msra.mxu0 0
        %1489 = vmatprep.subr.bf16.mxu0 0
        %1490 = vmatpush1.bf16.msra.mxu0 0
        %1491 = vmatprep.subr.bf16.mxu0 0
        %1492 = vmatpush1.bf16.msra.mxu0 0
        %1493 = vmatprep.mubr.bf16.mxu0 0
        %1494 = vmatmul.mubr.bf16.gmra.mrb[0].mxu0 %v1456
        %v1495 = vpop.f32.mrb[0].mxu0
        %v1496 = vadd.f32 0.0, %v1495
        %v1497 = vpop.f32.mrb[0].mxu0
        %v1498 = vpop.f32.mrb[0].mxu0
        %v1499 = vpop.f32.mrb[0].mxu0
        %1500 = vdwg.mxu0
        %1502 = vrot.lane.b32.xlu0 %v1496, 16
        %v1503 = vpop.permute.xlu0 %1502
        %v1505 = vsel %vm701, %v1386, %v1503
        %v1506 = vpack.c.bf16 %v1505, %v1505
        %s1507 = scalar_lea.vmem %s5, 16
        %v1508 = vld [vmem:[%s1507] sm:$0xf]
        %v1509 = vld [vmem:[%s1507 + $0x4] sm:$0xf]
        %v1510 = vld [vmem:[%s1507 + $0x8] sm:$0xf]
        %v1511 = vld [vmem:[%s1507 + $0xc] sm:$0xf]
        %s1512 = scalar_lea.vmem %s6, 1
        %v1513 = vld [vmem:[%s1512] sm:$0x1]
        %v1515 = vlaneseq
        %v1516 = vshrl.u32 %v1515, 7
        %v1517 = vsub.s32 0, %v1516
        %v1518 = vrot.slane %v1513, %v1517
        %v1524 = vunpack.c.l.b16 %v1508
        %v1525 = vunpack.c.l.b16 %v1509
        %v1526 = vunpack.c.l.b16 %v1510
        %v1527 = vunpack.c.l.b16 %v1511
        %v1528 = vpack.c.b16 %v1525, %v1524
        %v1529 = vpack.c.b16 %v1527, %v1526
        %v1533 = vsel %vm601, %v1506, 0
        %1535 = vmatprep.subr.bf16.mxu0 0
        %1536 = vmatpush1.bf16.msra.mxu0 %v1528
        %1537 = vmatprep.subr.bf16.mxu0 0
        %1538 = vmatpush1.bf16.msra.mxu0 %v1529
        %1539 = vmatprep.subr.bf16.mxu0 0
        %1540 = vmatpush1.bf16.msra.mxu0 0
        %1541 = vmatprep.subr.bf16.mxu0 0
        %1542 = vmatpush1.bf16.msra.mxu0 0
        %1543 = vmatprep.subr.bf16.mxu0 0
        %1544 = vmatpush1.bf16.msra.mxu0 0
        %1545 = vmatprep.subr.bf16.mxu0 0
        %1546 = vmatpush1.bf16.msra.mxu0 0
        %1547 = vmatprep.subr.bf16.mxu0 0
        %1548 = vmatpush1.bf16.msra.mxu0 0
        %1549 = vmatprep.subr.bf16.mxu0 0
        %1550 = vmatpush1.bf16.msra.mxu0 0
        %1551 = vmatprep.subr.bf16.mxu0 0
        %1552 = vmatpush1.bf16.msra.mxu0 0
        %1553 = vmatprep.subr.bf16.mxu0 0
        %1554 = vmatpush1.bf16.msra.mxu0 0
        %1555 = vmatprep.subr.bf16.mxu0 0
        %1556 = vmatpush1.bf16.msra.mxu0 0
        %1557 = vmatprep.subr.bf16.mxu0 0
        %1558 = vmatpush1.bf16.msra.mxu0 0
        %1559 = vmatprep.subr.bf16.mxu0 0
        %1560 = vmatpush1.bf16.msra.mxu0 0
        %1561 = vmatprep.subr.bf16.mxu0 0
        %1562 = vmatpush1.bf16.msra.mxu0 0
        %1563 = vmatprep.subr.bf16.mxu0 0
        %1564 = vmatpush1.bf16.msra.mxu0 0
        %1565 = vmatprep.subr.bf16.mxu0 0
        %1566 = vmatpush1.bf16.msra.mxu0 0
        %1567 = vmatprep.mubr.bf16.mxu0 0
        %1568 = vmatmul.mubr.bf16.gmra.mrb[0].mxu0 %v1533
        %v1569 = vpop.f32.mrb[0].mxu0
        %v1570 = vadd.f32 %v1518, %v1569
        %v1571 = vpop.f32.mrb[0].mxu0
        %v1572 = vpop.f32.mrb[0].mxu0
        %v1573 = vpop.f32.mrb[0].mxu0
        %1574 = vdwg.mxu0
        %v1575 = vadd.f32 %v1570, %v1211
        %s1576 = scalar_lea.vmem %s7, 1
        %v1577 = vld [vmem:[%s1576] sm:$0x1]
        %s1578 = scalar_lea.vmem %s8, 1
        %v1579 = vld [vmem:[%s1578] sm:$0x1]
        %v1580 = vsel %vm601, %v1575, 0.0
        %1581 = vadd.xlane.f32.xlu0 %v1580
        %v1582 = vpop.xlane.xlu0 %1581
        %v1583 = vmul.f32 %v1582, %v605
        %v1584 = vsub.f32 %v1575, %v1583
        %v1585 = vmul.f32 %v1584, %v1584
        %v1586 = vsel %vm601, %v1585, 0.0
        %1587 = vadd.xlane.f32.xlu0 %v1586
        %v1588 = vpop.xlane.xlu0 %1587
        %v1589 = vmul.f32 %v1588, %v605
        %v1590 = vadd.f32 %v1589, 1e-12
        %v1591 = vrsqrt.pop %v1590
        %v1592 = vmul.f32 %v1584, %v1591
        %v1594 = vlaneseq
        %v1595 = vshrl.u32 %v1594, 7
        %v1596 = vsub.s32 0, %v1595
        %v1597 = vrot.slane %v1577, %v1596
        %v1599 = vmul.f32 %v1592, %v1597
        %v1601 = vlaneseq
        %v1602 = vshrl.u32 %v1601, 7
        %v1603 = vsub.s32 0, %v1602
        %v1604 = vrot.slane %v1579, %v1603
        %v1606 = vadd.f32 %v1599, %v1604
        %v1607 = vpack.c.bf16 %v1606, %v1606
        %s1608 = scalar_lea.vmem %s9, 16
        %v1609 = vld [vmem:[%s1608] sm:$0xf]
        %v1610 = vld [vmem:[%s1608 + $0x4] sm:$0xf]
        %v1611 = vld [vmem:[%s1608 + $0x8] sm:$0xf]
        %v1612 = vld [vmem:[%s1608 + $0xc] sm:$0xf]
        %s1613 = scalar_lea.vmem %s10, 1
        %v1614 = vld [vmem:[%s1613] sm:$0x1]
        %v1616 = vlaneseq
        %v1617 = vshrl.u32 %v1616, 7
        %v1618 = vsub.s32 0, %v1617
        %v1619 = vrot.slane %v1614, %v1618
        %v1625 = vunpack.c.l.b16 %v1609
        %v1626 = vunpack.c.l.b16 %v1610
        %v1627 = vunpack.c.l.b16 %v1611
        %v1628 = vunpack.c.l.b16 %v1612
        %v1629 = vpack.c.b16 %v1626, %v1625
        %v1630 = vpack.c.b16 %v1628, %v1627
        %v1634 = vsel %vm601, %v1607, 0
        %1636 = vmatprep.subr.bf16.mxu0 0
        %1637 = vmatpush1.bf16.msra.mxu0 %v1629
        %1638 = vmatprep.subr.bf16.mxu0 0
        %1639 = vmatpush1.bf16.msra.mxu0 %v1630
        %1640 = vmatprep.subr.bf16.mxu0 0
        %1641 = vmatpush1.bf16.msra.mxu0 0
        %1642 = vmatprep.subr.bf16.mxu0 0
        %1643 = vmatpush1.bf16.msra.mxu0 0
        %1644 = vmatprep.subr.bf16.mxu0 0
        %1645 = vmatpush1.bf16.msra.mxu0 0
        %1646 = vmatprep.subr.bf16.mxu0 0
        %1647 = vmatpush1.bf16.msra.mxu0 0
        %1648 = vmatprep.subr.bf16.mxu0 0
        %1649 = vmatpush1.bf16.msra.mxu0 0
        %1650 = vmatprep.subr.bf16.mxu0 0
        %1651 = vmatpush1.bf16.msra.mxu0 0
        %1652 = vmatprep.subr.bf16.mxu0 0
        %1653 = vmatpush1.bf16.msra.mxu0 0
        %1654 = vmatprep.subr.bf16.mxu0 0
        %1655 = vmatpush1.bf16.msra.mxu0 0
        %1656 = vmatprep.subr.bf16.mxu0 0
        %1657 = vmatpush1.bf16.msra.mxu0 0
        %1658 = vmatprep.subr.bf16.mxu0 0
        %1659 = vmatpush1.bf16.msra.mxu0 0
        %1660 = vmatprep.subr.bf16.mxu0 0
        %1661 = vmatpush1.bf16.msra.mxu0 0
        %1662 = vmatprep.subr.bf16.mxu0 0
        %1663 = vmatpush1.bf16.msra.mxu0 0
        %1664 = vmatprep.subr.bf16.mxu0 0
        %1665 = vmatpush1.bf16.msra.mxu0 0
        %1666 = vmatprep.subr.bf16.mxu0 0
        %1667 = vmatpush1.bf16.msra.mxu0 0
        %1668 = vmatprep.mubr.bf16.mxu0 0
        %1669 = vmatmul.mubr.bf16.gmra.mrb[0].mxu0 %v1634
        %v1670 = vpop.f32.mrb[0].mxu0
        %v1671 = vadd.f32 %v1619, %v1670
        %v1672 = vpop.f32.mrb[0].mxu0
        %v1673 = vpop.f32.mrb[0].mxu0
        %v1674 = vpop.f32.mrb[0].mxu0
        %1675 = vdwg.mxu0
        %v1676 = vmul.f32 %v1671, 0.5
        %v1677 = vmul.f32 %v1671, 0.044715
        %v1678 = vmul.f32 %v1677, %v1671
        %v1679 = vmul.f32 %v1678, %v1671
        %v1680 = vadd.f32 %v1671, %v1679
        %v1681 = vmul.f32 %v1680, 0.7978846
        %v1682 = vtanh.pop %v1681
        %v1683 = vadd.f32 %v1682, 1.0
        %v1684 = vmul.f32 %v1676, %v1683
        %v1685 = vpack.c.bf16 %v1684, %v1684
        %s1686 = scalar_lea.vmem %s11, 32
        %v1687 = vld [vmem:[%s1686] sm:$0xf]
        %v1688 = vld [vmem:[%s1686 + $0x4] sm:$0xf]
        %v1689 = vld [vmem:[%s1686 + $0x8] sm:$0xf]
        %v1690 = vld [vmem:[%s1686 + $0xc] sm:$0xf]
        %v1691 = vld [vmem:[%s1686 + $0x10] sm:$0xf]
        %v1692 = vld [vmem:[%s1686 + $0x14] sm:$0xf]
        %v1693 = vld [vmem:[%s1686 + $0x18] sm:$0xf]
        %v1694 = vld [vmem:[%s1686 + $0x1c] sm:$0xf]
        %s1695 = scalar_lea.vmem %s12, 1
        %v1696 = vld [vmem:[%s1695] sm:$0x1]
        %v1698 = vlaneseq
        %v1699 = vshrl.u32 %v1698, 7
        %v1700 = vsub.s32 0, %v1699
        %v1701 = vrot.slane %v1696, %v1700
        %v1711 = vunpack.c.l.b16 %v1687
        %v1712 = vunpack.c.l.b16 %v1688
        %v1713 = vunpack.c.l.b16 %v1689
        %v1714 = vunpack.c.l.b16 %v1690
        %v1715 = vunpack.c.l.b16 %v1691
        %v1716 = vunpack.c.l.b16 %v1692
        %v1717 = vunpack.c.l.b16 %v1693
        %v1718 = vunpack.c.l.b16 %v1694
        %v1719 = vpack.c.b16 %v1712, %v1711
        %v1720 = vpack.c.b16 %v1714, %v1713
        %v1721 = vpack.c.b16 %v1716, %v1715
        %v1722 = vpack.c.b16 %v1718, %v1717
        %v1728 = vsel %vm1138, %v1685, 0
        %1730 = vmatprep.subr.bf16.mxu0 0
        %1731 = vmatpush1.bf16.msra.mxu0 %v1719
        %1732 = vmatprep.subr.bf16.mxu0 0
        %1733 = vmatpush1.bf16.msra.mxu0 %v1720
        %1734 = vmatprep.subr.bf16.mxu0 0
        %1735 = vmatpush1.bf16.msra.mxu0 %v1721
        %1736 = vmatprep.subr.bf16.mxu0 0
        %1737 = vmatpush1.bf16.msra.mxu0 %v1722
        %1738 = vmatprep.subr.bf16.mxu0 0
        %1739 = vmatpush1.bf16.msra.mxu0 0
        %1740 = vmatprep.subr.bf16.mxu0 0
        %1741 = vmatpush1.bf16.msra.mxu0 0
        %1742 = vmatprep.subr.bf16.mxu0 0
        %1743 = vmatpush1.bf16.msra.mxu0 0
        %1744 = vmatprep.subr.bf16.mxu0 0
        %1745 = vmatpush1.bf16.msra.mxu0 0
        %1746 = vmatprep.subr.bf16.mxu0 0
        %1747 = vmatpush1.bf16.msra.mxu0 0
        %1748 = vmatprep.subr.bf16.mxu0 0
        %1749 = vmatpush1.bf16.msra.mxu0 0
        %1750 = vmatprep.subr.bf16.mxu0 0
        %1751 = vmatpush1.bf16.msra.mxu0 0
        %1752 = vmatprep.subr.bf16.mxu0 0
        %1753 = vmatpush1.bf16.msra.mxu0 0
        %1754 = vmatprep.subr.bf16.mxu0 0
        %1755 = vmatpush1.bf16.msra.mxu0 0
        %1756 = vmatprep.subr.bf16.mxu0 0
        %1757 = vmatpush1.bf16.msra.mxu0 0
        %1758 = vmatprep.subr.bf16.mxu0 0
        %1759 = vmatpush1.bf16.msra.mxu0 0
        %1760 = vmatprep.subr.bf16.mxu0 0
        %1761 = vmatpush1.bf16.msra.mxu0 0
        %1762 = vmatprep.mubr.bf16.mxu0 0
        %1763 = vmatmul.mubr.bf16.gmra.mrb[0].mxu0 %v1728
        %v1764 = vpop.f32.mrb[0].mxu0
        %v1765 = vadd.f32 %v1701, %v1764
        %v1766 = vpop.f32.mrb[0].mxu0
        %v1767 = vpop.f32.mrb[0].mxu0
        %v1768 = vpop.f32.mrb[0].mxu0
        %1769 = vdwg.mxu0
        %v1770 = vadd.f32 %v1765, %v1606
        %s1771 = scalar_lea.vmem %s13, 1
        %v1772 = vld [vmem:[%s1771] sm:$0x1]
        %s1773 = scalar_lea.vmem %s14, 1
        %v1774 = vld [vmem:[%s1773] sm:$0x1]
        %v1775 = vsel %vm601, %v1770, 0.0
        %1776 = vadd.xlane.f32.xlu0 %v1775
        %v1777 = vpop.xlane.xlu0 %1776
        %v1778 = vmul.f32 %v1777, %v605
        %v1779 = vsub.f32 %v1770, %v1778
        %v1780 = vmul.f32 %v1779, %v1779
        %v1781 = vsel %vm601, %v1780, 0.0
        %1782 = vadd.xlane.f32.xlu0 %v1781
        %v1783 = vpop.xlane.xlu0 %1782
        %v1784 = vmul.f32 %v1783, %v605
        %v1785 = vadd.f32 %v1784, 1e-12
        %v1786 = vrsqrt.pop %v1785
        %v1787 = vmul.f32 %v1779, %v1786
        %v1789 = vlaneseq
        %v1790 = vshrl.u32 %v1789, 7
        %v1791 = vsub.s32 0, %v1790
        %v1792 = vrot.slane %v1772, %v1791
        %v1794 = vmul.f32 %v1787, %v1792
        %v1796 = vlaneseq
        %v1797 = vshrl.u32 %v1796, 7
        %v1798 = vsub.s32 0, %v1797
        %v1799 = vrot.slane %v1774, %v1798
        %v1801 = vadd.f32 %v1794, %v1799
        %v1802 = vpack.c.bf16 %v1801, %v1801
        %v1803 = vld [vmem:[%s15] sm:$0xf]
        %v1804 = vld [vmem:[%s15 + $0x4] sm:$0xf]
        %v1805 = vld [vmem:[%s15 + $0x8] sm:$0xf]
        %v1806 = vld [vmem:[%s15 + $0xc] sm:$0xf]
        %v1807 = vld [vmem:[%s16] sm:$0x1]
        %v1812 = vunpack.c.l.b16 %v1803
        %v1813 = vunpack.c.l.b16 %v1804
        %v1814 = vunpack.c.l.b16 %v1805
        %v1815 = vunpack.c.l.b16 %v1806
        %v1816 = vpack.c.b16 %v1813, %v1812
        %v1817 = vpack.c.b16 %v1815, %v1814
        %v1821 = vsel %vm601, %v1802, 0
        %1823 = vmatprep.subr.bf16.mxu0 0
        %1824 = vmatpush1.bf16.msra.mxu0 %v1816
        %1825 = vmatprep.subr.bf16.mxu0 0
        %1826 = vmatpush1.bf16.msra.mxu0 %v1817
        %1827 = vmatprep.subr.bf16.mxu0 0
        %1828 = vmatpush1.bf16.msra.mxu0 0
        %1829 = vmatprep.subr.bf16.mxu0 0
        %1830 = vmatpush1.bf16.msra.mxu0 0
        %1831 = vmatprep.subr.bf16.mxu0 0
        %1832 = vmatpush1.bf16.msra.mxu0 0
        %1833 = vmatprep.subr.bf16.mxu0 0
        %1834 = vmatpush1.bf16.msra.mxu0 0
        %1835 = vmatprep.subr.bf16.mxu0 0
        %1836 = vmatpush1.bf16.msra.mxu0 0
        %1837 = vmatprep.subr.bf16.mxu0 0
        %1838 = vmatpush1.bf16.msra.mxu0 0
        %1839 = vmatprep.subr.bf16.mxu0 0
        %1840 = vmatpush1.bf16.msra.mxu0 0
        %1841 = vmatprep.subr.bf16.mxu0 0
        %1842 = vmatpush1.bf16.msra.mxu0 0
        %1843 = vmatprep.subr.bf16.mxu0 0
        %1844 = vmatpush1.bf16.msra.mxu0 0
        %1845 = vmatprep.subr.bf16.mxu0 0
        %1846 = vmatpush1.bf16.msra.mxu0 0
        %1847 = vmatprep.subr.bf16.mxu0 0
        %1848 = vmatpush1.bf16.msra.mxu0 0
        %1849 = vmatprep.subr.bf16.mxu0 0
        %1850 = vmatpush1.bf16.msra.mxu0 0
        %1851 = vmatprep.subr.bf16.mxu0 0
        %1852 = vmatpush1.bf16.msra.mxu0 0
        %1853 = vmatprep.subr.bf16.mxu0 0
        %1854 = vmatpush1.bf16.msra.mxu0 0
        %1855 = vmatprep.mubr.bf16.mxu0 0
        %1856 = vmatmul.mubr.bf16.gmra.mrb[0].mxu0 %v1821
        %v1857 = vpop.f32.mrb[0].mxu0
        %v1858 = vadd.f32 %v1807, %v1857
        %v1859 = vpop.f32.mrb[0].mxu0
        %v1860 = vpop.f32.mrb[0].mxu0
        %v1861 = vpop.f32.mrb[0].mxu0
        %1862 = vdwg.mxu0
        %v1863 = vtanh.pop %v1858
        %v1864 = vpack.c.bf16 %v1863, %v1863
        %v1865 = vld [vmem:[%s17] sm:$0xf]
        %v1866 = vld [vmem:[%s17 + $0x4] sm:$0xf]
        %v1867 = vld [vmem:[%s17 + $0x8] sm:$0xf]
        %v1868 = vld [vmem:[%s17 + $0xc] sm:$0xf]
        %v1869 = vld [vmem:[%s18] sm:$0x1]
        %v1874 = vunpack.c.l.b16 %v1865
        %v1875 = vunpack.c.l.b16 %v1866
        %v1876 = vunpack.c.l.b16 %v1867
        %v1877 = vunpack.c.l.b16 %v1868
        %v1878 = vpack.c.b16 %v1875, %v1874
        %v1879 = vpack.c.b16 %v1877, %v1876
        %v1883 = vsel %vm601, %v1864, 0
        %1885 = vmatprep.subr.bf16.mxu0 0
        %1886 = vmatpush1.bf16.msra.mxu0 %v1878
        %1887 = vmatprep.subr.bf16.mxu0 0
        %1888 = vmatpush1.bf16.msra.mxu0 %v1879
        %1889 = vmatprep.subr.bf16.mxu0 0
        %1890 = vmatpush1.bf16.msra.mxu0 0
        %1891 = vmatprep.subr.bf16.mxu0 0
        %1892 = vmatpush1.bf16.msra.mxu0 0
        %1893 = vmatprep.subr.bf16.mxu0 0
        %1894 = vmatpush1.bf16.msra.mxu0 0
        %1895 = vmatprep.subr.bf16.mxu0 0
        %1896 = vmatpush1.bf16.msra.mxu0 0
        %1897 = vmatprep.subr.bf16.mxu0 0
        %1898 = vmatpush1.bf16.msra.mxu0 0
        %1899 = vmatprep.subr.bf16.mxu0 0
        %1900 = vmatpush1.bf16.msra.mxu0 0
        %1901 = vmatprep.subr.bf16.mxu0 0
        %1902 = vmatpush1.bf16.msra.mxu0 0
        %1903 = vmatprep.subr.bf16.mxu0 0
        %1904 = vmatpush1.bf16.msra.mxu0 0
        %1905 = vmatprep.subr.bf16.mxu0 0
        %1906 = vmatpush1.bf16.msra.mxu0 0
        %1907 = vmatprep.subr.bf16.mxu0 0
        %1908 = vmatpush1.bf16.msra.mxu0 0
        %1909 = vmatprep.subr.bf16.mxu0 0
        %1910 = vmatpush1.bf16.msra.mxu0 0
        %1911 = vmatprep.subr.bf16.mxu0 0
        %1912 = vmatpush1.bf16.msra.mxu0 0
        %1913 = vmatprep.subr.bf16.mxu0 0
        %1914 = vmatpush1.bf16.msra.mxu0 0
        %1915 = vmatprep.subr.bf16.mxu0 0
        %1916 = vmatpush1.bf16.msra.mxu0 0
        %1917 = vmatprep.mubr.bf16.mxu0 0
        %1918 = vmatmul.mubr.bf16.gmra.mrb[0].mxu0 %v1883
        %v1919 = vpop.f32.mrb[0].mxu0
        %v1920 = vadd.f32 %v1869, %v1919
        %v1921 = vpop.f32.mrb[0].mxu0
        %v1922 = vpop.f32.mrb[0].mxu0
        %v1923 = vpop.f32.mrb[0].mxu0
        %1924 = vdwg.mxu0
        %1925 = vst [vmem:[%s592] sm:$0x1] %v1920
        %s1926 = sand.u32 %s445, 1
        %s1927 = scalar_lea.sflag [#allocation3], %s1926
        %s1928 = sand.u32 %s445, 1
        %s1929 = scalar_lea.vmem [#allocation2], %s1928
        // Predicated region
        $region97: #{bert_encoder_forward.1} parent=95 // pred_check
          %p1930 = pneg %p455
        $region98: #{bert_encoder_forward.1} parent=95 // pred_check_branch
          %1932 = sbr.rel (%p1930) target = $region100
        $region99: #{bert_encoder_forward.1} parent=95 // pred_region
          %s1934 = ssub.s32 16, 16
          %1935 = vsyncadd %s1927, %s1934
          %s1936 = smul.addr %s33, 16
          %s1937 = scalar_lea.hbm %s19, %s1936
          %s1939 = sshll.u32 %s1929, 4
          %s1940 = int_to_ptr.vmem [resolvable:$true] %s1939
          %1942 = dma.vmem_to_hbm [thread:$0]  %s1940, 16, %s1937, %s1927
        $region100: #{bert_encoder_forward.1} parent=95 // pred_fallthru
          _
      $region96: #{bert_encoder_forward.1} parent=5 // pred_fallthru
        _
      %p1943 = scmp.le.s32.totalorder 2, %s28
      // Predicated region
      $region101: #{bert_encoder_forward.1} parent=5 // pred_check
        %p1944 = pneg %p1943
      $region102: #{bert_encoder_forward.1} parent=5 // pred_check_branch
        %1946 = sbr.rel (%p1944) target = $region104
      $region103: #{bert_encoder_forward.1} parent=5 // pred_region
        %s1947 = ssub.s32 %s28, 2
        // Predicated region
        $region105: #{bert_encoder_forward.1} parent=103 // pred_check
          %p1948 = pneg %p461
        $region106: #{bert_encoder_forward.1} parent=103 // pred_check_branch
          %1950 = sbr.rel (%p1948) target = $region108
        $region107: #{bert_encoder_forward.1} parent=103 // pred_region
          %s1951 = sand.u32 %s446, 1
          %s1952 = scalar_lea.sflag [#allocation3], %s1951
          %s1953 = sand.u32 %s446, 1
          %s1954 = scalar_lea.vmem [#allocation2], %s1953
          %1955 = dma.done %s1952, 16
        $region108: #{bert_encoder_forward.1} parent=103 // pred_fallthru
          _
      $region104: #{bert_encoder_forward.1} parent=5 // pred_fallthru
        _
    $region6: #{bert_encoder_forward.1} parent=1 // loop_footer
      %s32 = sadd.s32 1, %s28
    $region7: #{bert_encoder_forward.1} parent=1 // loop_footer_branch
      %27 = sbr.rel target = $region3
    $region8: #{bert_encoder_forward.1} parent=1 // loop_exit
      _
    %1956 = vsyncpa [#allocation3], 1
    %s1957 = scalar_lea.sflag [#allocation3], 1
    %1958 = vsyncpa %s1957, 1

</llo_original>
